<compile_context>
chip_gen: v6e
topology: v6e:2x2x1
jax: 0.10.0
libtpu: 0.0.40
codegen_flags: <defaults>
</compile_context>

<pallas_src>
import math

import jax
import jax.numpy as jnp
from jax.experimental import pallas as pl
from jax.experimental.pallas import tpu as pltpu


VMEM_LIMIT_BYTES = 40 * 1024 * 1024  # safe on v5e/v6e (128 MiB) and v7x (64 MiB)
_M_TILE_CACHE = []


def _target_m_tile():
    """Generation-aware M tile: smaller on 64-MiB-VMEM chips (v7x)."""
    if not _M_TILE_CACHE:
        try:
            vmem_bytes = pltpu.get_tpu_info().vmem_capacity_bytes
        except Exception:  # pragma: no cover - conservative fallback
            vmem_bytes = 64 << 20
        _M_TILE_CACHE.append(1024 if vmem_bytes >= (100 << 20) else 512)
    return _M_TILE_CACHE[0]


# ----------------------------------------------------------------------------
# Pallas kernels
# ----------------------------------------------------------------------------
def fused_conv_kernel(p_ref, w_ref, b_ref, s_ref, t_ref, o_ref):
    """Fused (im2col-matmul + bias + LeakyReLU(0.2) + BN-affine), transposed.

    p_ref: (K, tm) bf16 patch tile; w_ref: (Cout, K) bf16 (resident);
    b/s/t: (Cout, 1) f32 (resident); o_ref: (Cout, tm) bf16 (lane-dense).
    """
    acc = jnp.dot(w_ref[...], p_ref[...], preferred_element_type=jnp.float32)
    acc = acc + b_ref[...]                       # conv bias (broadcast over M)
    acc = jnp.where(acc > 0, acc, 0.2 * acc)     # LeakyReLU(0.2)  (f32)
    acc = acc * s_ref[...] + t_ref[...]          # BatchNorm2d folded to affine
    o_ref[...] = acc.astype(o_ref.dtype)


def head_kernel(x_ref, w_ref, b_ref, o_ref, acc_ref):
    """Final adverse layer: Linear(F -> 1, padded to 128 lanes) + Sigmoid.

    K (feature) axis is a reduction grid axis; f32 accumulator in VMEM.
    """
    @pl.when(pl.program_id(0) == 0)
    def _init():
        acc_ref[...] = jnp.zeros_like(acc_ref)

    acc_ref[...] += jnp.dot(x_ref[...], w_ref[...],
                            preferred_element_type=jnp.float32)

    @pl.when(pl.program_id(0) == pl.num_programs(0) - 1)
    def _finalize():
        z = acc_ref[...] + b_ref[...]
        o_ref[...] = (1.0 / (1.0 + jnp.exp(-z))).astype(o_ref.dtype)


# ----------------------------------------------------------------------------
# Conv block: im2col (glue, bf16, CNHW) + fused, M-tiled Pallas kernel
# ----------------------------------------------------------------------------
def conv_block(x_cnhw, w, b, scale, shift):
    """x_cnhw: (Cin, N, H, W) bf16.  w: (Cout, Cin, 3, 3) PyTorch layout (f32).
    Returns (Cout, N, Hout, Wout) bf16, Hout = (H-1)//2 + 1 (stride 2, pad 1)."""
    Cin, N, H, W = x_cnhw.shape
    Cout = w.shape[0]
    Hout = (H - 1) // 2 + 1
    Wout = (W - 1) // 2 + 1
    M = N * Hout * Wout
    K = 9 * Cin

    # im2col, transposed: rows ordered (kh, kw, cin), columns = (n, oh, ow).
    xp = jnp.pad(x_cnhw, ((0, 0), (0, 0), (1, 1), (1, 1)))
    taps = [xp[:, :, kh::2, kw::2][:, :, :Hout, :Wout]
            for kh in range(3) for kw in range(3)]
    patches_t = jnp.stack(taps, axis=0).reshape(K, M).astype(jnp.bfloat16)

    # Kernel-ready parameters (bf16 weights, f32 per-channel affine columns).
    w_t = jnp.transpose(w, (0, 2, 3, 1)).reshape(Cout, K).astype(jnp.bfloat16)
    b_col = b.reshape(Cout, 1).astype(jnp.float32)
    s_col = scale.reshape(Cout, 1).astype(jnp.float32)
    t_col = shift.reshape(Cout, 1).astype(jnp.float32)

    tm_target = _target_m_tile()
    tm = M if M <= tm_target else tm_target      # full dim or multiple of 128
    grid = (pl.cdiv(M, tm),)

    cost = pl.CostEstimate(
        flops=2 * M * K * Cout,
        transcendentals=0,
        bytes_accessed=2 * (K * M + Cout * K + Cout * M) + 12 * Cout)

    out_t = pl.pallas_call(
        fused_conv_kernel,
        out_shape=jax.ShapeDtypeStruct((Cout, M), jnp.bfloat16),
        grid=grid,
        in_specs=[
            pl.BlockSpec((K, tm), lambda i: (0, i)),       # patch tile (lane-dense)
            pl.BlockSpec((Cout, K), lambda i: (0, 0)),     # weights, VMEM-resident
            pl.BlockSpec((Cout, 1), lambda i: (0, 0)),     # bias, resident
            pl.BlockSpec((Cout, 1), lambda i: (0, 0)),     # BN scale, resident
            pl.BlockSpec((Cout, 1), lambda i: (0, 0)),     # BN shift, resident
        ],
        out_specs=pl.BlockSpec((Cout, tm), lambda i: (0, i)),
        compiler_params=pltpu.CompilerParams(
            dimension_semantics=("parallel",),
            vmem_limit_bytes=VMEM_LIMIT_BYTES),
        cost_estimate=cost,
    )(patches_t, w_t, b_col, s_col, t_col)

    return out_t.reshape(Cout, N, Hout, Wout)


# ----------------------------------------------------------------------------
# Head: Linear(F -> 1) + Sigmoid, K-tiled, 128-lane-padded output
# ----------------------------------------------------------------------------
def linear_sigmoid(flat_bf16, lin_w, lin_b):
    N, F = flat_bf16.shape
    LANES = 128
    w_pad = jnp.pad(lin_w, ((0, 0), (0, LANES - lin_w.shape[1]))).astype(jnp.bfloat16)
    b_pad = jnp.pad(lin_b, ((0, 0), (0, LANES - lin_b.shape[1]))).astype(jnp.float32)

    # F is always a multiple of 128 (F = 128*ds*ds); gcd keeps tk | F and 128 | tk.
    tk = math.gcd(F, 2048)
    grid = (F // tk,)

    out = pl.pallas_call(
        head_kernel,
        out_shape=jax.ShapeDtypeStruct((N, LANES), jnp.float32),
        grid=grid,
        in_specs=[
            pl.BlockSpec((N, tk), lambda k: (0, k)),
            pl.BlockSpec((tk, LANES), lambda k: (k, 0)),
            pl.BlockSpec((1, LANES), lambda k: (0, 0)),
        ],
        out_specs=pl.BlockSpec((N, LANES), lambda k: (0, 0)),
        scratch_shapes=[pltpu.VMEM((N, LANES), jnp.float32)],
        compiler_params=pltpu.CompilerParams(
            dimension_semantics=("arbitrary",),
            vmem_limit_bytes=VMEM_LIMIT_BYTES),
        cost_estimate=pl.CostEstimate(
            flops=2 * N * F * LANES,
            transcendentals=N * LANES,
            bytes_accessed=2 * (N * F + F * LANES) + 4 * (N + 1) * LANES),
    )(flat_bf16.astype(jnp.bfloat16), w_pad, b_pad)
    return out[:, :1]


# ----------------------------------------------------------------------------
# Full Discriminator forward
# ----------------------------------------------------------------------------
def make_params(channels, image_size, key):
    """Deterministic synthetic parameters (PyTorch module shapes, f32)."""
    chans = [channels, 16, 32, 64, 128]
    ds = image_size // 2 ** 4
    params = {"blocks": [], "ds": ds}
    for li in range(4):
        cin, cout = chans[li], chans[li + 1]
        key, kw, kb, kg, kbeta = jax.random.split(key, 5)
        w = 0.1 * jax.random.normal(kw, (cout, cin, 3, 3), jnp.float32)
        b = 0.1 * jax.random.normal(kb, (cout,), jnp.float32)
        if li == 0:
            # first block: bn=False -> identity affine
            scale = jnp.ones((cout,), jnp.float32)
            shift = jnp.zeros((cout,), jnp.float32)
        else:
            # BatchNorm2d(cout, 0.8): positional arg is eps=0.8.
            # Eval mode: running_mean=0, running_var=1.
            eps = 0.8
            gamma = 1.0 + 0.1 * jax.random.normal(kg, (cout,), jnp.float32)
            beta = 0.1 * jax.random.normal(kbeta, (cout,), jnp.float32)
            scale = gamma / jnp.sqrt(1.0 + eps)
            shift = beta
        params["blocks"].append((w, b, scale, shift))
    key, kw, kb = jax.random.split(key, 3)
    feat = 128 * ds * ds
    params["lin_w"] = 0.1 * jax.random.normal(kw, (feat, 1), jnp.float32)
    params["lin_b"] = 0.1 * jax.random.normal(kb, (1, 1), jnp.float32)
    return params


@jax.jit
def discriminator_forward(image_nchw, params):
    # One small layout change of the raw input: NCHW -> CNHW (channels leading),
    # cast to bf16.  All subsequent layers stay in CNHW bf16 (no per-layer
    # transposes).
    x = jnp.transpose(image_nchw, (1, 0, 2, 3)).astype(jnp.bfloat16)
    for (w, b, scale, shift) in params["blocks"]:
        x = conv_block(x, w, b, scale, shift)
    # Match PyTorch out.view(N, -1) on NCHW.  The final feature map is 16x
    # spatially downsampled, so this transpose is tiny (not a full-activation
    # HBM transpose).
    C, N, dh, dw = x.shape
    flat = jnp.transpose(x, (1, 0, 2, 3)).reshape(N, C * dh * dw)
    return linear_sigmoid(flat, params["lin_w"], params["lin_b"])


# ----------------------------------------------------------------------------
# Pure-JAX f32 reference (for correctness check only)
# ----------------------------------------------------------------------------
def reference_forward(image_nchw, params):
    x = jnp.transpose(image_nchw, (0, 2, 3, 1))
    for (w, b, scale, shift) in params["blocks"]:
        rhs = jnp.transpose(w, (2, 3, 1, 0))  # HWIO
        y = jax.lax.conv_general_dilated(
            x, rhs, window_strides=(2, 2), padding=((1, 1), (1, 1)),
            dimension_numbers=("NHWC", "HWIO", "NHWC"))
        y = y + b[None, None, None, :]
        y = jnp.where(y > 0, y, 0.2 * y)
        x = y * scale[None, None, None, :] + shift[None, None, None, :]
    N = x.shape[0]
    flat = jnp.transpose(x, (0, 3, 1, 2)).reshape(N, -1)
    logits = flat @ params["lin_w"] + params["lin_b"]
    return jax.nn.sigmoid(logits)


if __name__ == "__main__":
    batch, channels, image_size = 2, 4, 16
    key = jax.random.PRNGKey(0)
    k_img, k_par = jax.random.split(key)
    image = jax.random.normal(k_img, (batch, channels, image_size, image_size),
                              jnp.float32)
    params = make_params(channels, image_size, k_par)

    out = discriminator_forward(image, params)
    out = jax.block_until_ready(out)

    ref = jax.block_until_ready(reference_forward(image, params))
    assert out.shape == (batch, 1), out.shape
    # bf16 activations/weights (f32 accumulation) => relaxed tolerance vs f32 ref.
    assert jnp.allclose(out, ref, atol=3e-2, rtol=3e-2), (out, ref)
    print("KERNEL_OK")
</pallas_src>

<mosaic_0001>
module attributes {stable_mosaic.version = 11 : i64} {
  func.func @fused_conv_kernel(%arg0: i32, %arg1: memref<36x128xbf16, #tpu.memory_space<vmem>>, %arg2: memref<16x36xbf16, #tpu.memory_space<vmem>>, %arg3: memref<16x1xf32, #tpu.memory_space<vmem>>, %arg4: memref<16x1xf32, #tpu.memory_space<vmem>>, %arg5: memref<16x1xf32, #tpu.memory_space<vmem>>, %arg6: memref<16x128xbf16, #tpu.memory_space<vmem>>) attributes {dimension_semantics = [#tpu.dimension_semantics<parallel>], iteration_bounds = array<i64: 1>, scalar_prefetch = 0 : i64, scratch_operands = 0 : i64, tpu.core_type = #tpu.core_type<tc>, window_params = [{transform_indices = @transform_0, window_bounds = array<i64: 36, 128>}, {pipeline_mode = #tpu.pipeline_mode<synchronous>, transform_indices = @transform_1, window_bounds = array<i64: 16, 36>}, {pipeline_mode = #tpu.pipeline_mode<synchronous>, transform_indices = @transform_2, window_bounds = array<i64: 16, 1>}, {pipeline_mode = #tpu.pipeline_mode<synchronous>, transform_indices = @transform_3, window_bounds = array<i64: 16, 1>}, {pipeline_mode = #tpu.pipeline_mode<synchronous>, transform_indices = @transform_4, window_bounds = array<i64: 16, 1>}, {transform_indices = @transform_5, window_bounds = array<i64: 16, 128>}]} {
    %c0 = arith.constant 0 : index
    %c0_0 = arith.constant 0 : index
    %0 = vector.load %arg2[%c0, %c0_0] : memref<16x36xbf16, #tpu.memory_space<vmem>>, vector<16x36xbf16>
    %c0_1 = arith.constant 0 : index
    %c0_2 = arith.constant 0 : index
    %1 = vector.load %arg1[%c0_1, %c0_2] : memref<36x128xbf16, #tpu.memory_space<vmem>>, vector<36x128xbf16>
    %cst = arith.constant dense<0.000000e+00> : vector<16x128xf32>
    %2 = tpu.matmul %0, %1, %cst {dimension_numbers = #tpu.dot_dimension_numbers<[1], [0], [0], [1], [0, 0, 1, 1], [], []>} : vector<16x36xbf16>, vector<36x128xbf16>, vector<16x128xf32> -> vector<16x128xf32>
    %c0_3 = arith.constant 0 : index
    %c0_4 = arith.constant 0 : index
    %3 = vector.load %arg3[%c0_3, %c0_4] : memref<16x1xf32, #tpu.memory_space<vmem>>, vector<16x1xf32>
    %4 = vector.broadcast %3 : vector<16x1xf32> to vector<16x128xf32>
    %5 = arith.addf %2, %4 : vector<16x128xf32>
    %cst_5 = arith.constant 0.000000e+00 : f32
    %6 = vector.broadcast %cst_5 : f32 to vector<16x128xf32>
    %7 = arith.cmpf ogt, %5, %6 : vector<16x128xf32>
    %cst_6 = arith.constant 2.000000e-01 : f32
    %8 = vector.broadcast %cst_6 : f32 to vector<16x128xf32>
    %9 = arith.mulf %8, %5 : vector<16x128xf32>
    %10 = arith.select %7, %5, %9 : vector<16x128xi1>, vector<16x128xf32>
    %c0_7 = arith.constant 0 : index
    %c0_8 = arith.constant 0 : index
    %11 = vector.load %arg4[%c0_7, %c0_8] : memref<16x1xf32, #tpu.memory_space<vmem>>, vector<16x1xf32>
    %12 = vector.broadcast %11 : vector<16x1xf32> to vector<16x128xf32>
    %13 = arith.mulf %10, %12 : vector<16x128xf32>
    %c0_9 = arith.constant 0 : index
    %c0_10 = arith.constant 0 : index
    %14 = vector.load %arg5[%c0_9, %c0_10] : memref<16x1xf32, #tpu.memory_space<vmem>>, vector<16x1xf32>
    %15 = vector.broadcast %14 : vector<16x1xf32> to vector<16x128xf32>
    %16 = arith.addf %13, %15 : vector<16x128xf32>
    %17 = arith.truncf %16 : vector<16x128xf32> to vector<16x128xbf16>
    %c0_11 = arith.constant 0 : index
    %c0_12 = arith.constant 0 : index
    %18 = vector.load %arg6[%c0_11, %c0_12] : memref<16x128xbf16, #tpu.memory_space<vmem>>, vector<16x128xbf16>
    tpu.vector_store %arg6[%c0_11, %c0_12], %17 {strides = array<i32>} : memref<16x128xbf16, #tpu.memory_space<vmem>>, vector<16x128xbf16>,
    return
  }
  func.func @transform_0(%arg0: i32) -> (i32, i32) {
    %c0_i32 = arith.constant 0 : i32
    %c0_i32_0 = arith.constant 0 : i32
    return %c0_i32, %arg0 : i32, i32
  }
  func.func @transform_1(%arg0: i32) -> (i32, i32) {
    %c0_i32 = arith.constant 0 : i32
    %c0_i32_0 = arith.constant 0 : i32
    %c0_i32_1 = arith.constant 0 : i32
    return %c0_i32, %c0_i32_0 : i32, i32
  }
  func.func @transform_2(%arg0: i32) -> (i32, i32) {
    %c0_i32 = arith.constant 0 : i32
    %c0_i32_0 = arith.constant 0 : i32
    %c0_i32_1 = arith.constant 0 : i32
    return %c0_i32, %c0_i32_0 : i32, i32
  }
  func.func @transform_3(%arg0: i32) -> (i32, i32) {
    %c0_i32 = arith.constant 0 : i32
    %c0_i32_0 = arith.constant 0 : i32
    %c0_i32_1 = arith.constant 0 : i32
    return %c0_i32, %c0_i32_0 : i32, i32
  }
  func.func @transform_4(%arg0: i32) -> (i32, i32) {
    %c0_i32 = arith.constant 0 : i32
    %c0_i32_0 = arith.constant 0 : i32
    %c0_i32_1 = arith.constant 0 : i32
    return %c0_i32, %c0_i32_0 : i32, i32
  }
  func.func @transform_5(%arg0: i32) -> (i32, i32) {
    %c0_i32 = arith.constant 0 : i32
    %c0_i32_0 = arith.constant 0 : i32
    return %c0_i32, %arg0 : i32, i32
  }
}

module attributes {stable_mosaic.version = 11 : i64} {
  func.func @fused_conv_kernel(%arg0: i32, %arg1: memref<144x32xbf16, #tpu.memory_space<vmem>>, %arg2: memref<32x144xbf16, #tpu.memory_space<vmem>>, %arg3: memref<32x1xf32, #tpu.memory_space<vmem>>, %arg4: memref<32x1xf32, #tpu.memory_space<vmem>>, %arg5: memref<32x1xf32, #tpu.memory_space<vmem>>, %arg6: memref<32x32xbf16, #tpu.memory_space<vmem>>) attributes {dimension_semantics = [#tpu.dimension_semantics<parallel>], iteration_bounds = array<i64: 1>, scalar_prefetch = 0 : i64, scratch_operands = 0 : i64, tpu.core_type = #tpu.core_type<tc>, window_params = [{transform_indices = @transform_0, window_bounds = array<i64: 144, 32>}, {pipeline_mode = #tpu.pipeline_mode<synchronous>, transform_indices = @transform_1, window_bounds = array<i64: 32, 144>}, {pipeline_mode = #tpu.pipeline_mode<synchronous>, transform_indices = @transform_2, window_bounds = array<i64: 32, 1>}, {pipeline_mode = #tpu.pipeline_mode<synchronous>, transform_indices = @transform_3, window_bounds = array<i64: 32, 1>}, {pipeline_mode = #tpu.pipeline_mode<synchronous>, transform_indices = @transform_4, window_bounds = array<i64: 32, 1>}, {transform_indices = @transform_5, window_bounds = array<i64: 32, 32>}]} {
    %c0 = arith.constant 0 : index
    %c0_0 = arith.constant 0 : index
    %0 = vector.load %arg2[%c0, %c0_0] : memref<32x144xbf16, #tpu.memory_space<vmem>>, vector<32x144xbf16>
    %c0_1 = arith.constant 0 : index
    %c0_2 = arith.constant 0 : index
    %1 = vector.load %arg1[%c0_1, %c0_2] : memref<144x32xbf16, #tpu.memory_space<vmem>>, vector<144x32xbf16>
    %cst = arith.constant dense<0.000000e+00> : vector<32x32xf32>
    %2 = tpu.matmul %0, %1, %cst {dimension_numbers = #tpu.dot_dimension_numbers<[1], [0], [0], [1], [0, 0, 1, 1], [], []>} : vector<32x144xbf16>, vector<144x32xbf16>, vector<32x32xf32> -> vector<32x32xf32>
    %c0_3 = arith.constant 0 : index
    %c0_4 = arith.constant 0 : index
    %3 = vector.load %arg3[%c0_3, %c0_4] : memref<32x1xf32, #tpu.memory_space<vmem>>, vector<32x1xf32>
    %4 = vector.broadcast %3 : vector<32x1xf32> to vector<32x32xf32>
    %5 = arith.addf %2, %4 : vector<32x32xf32>
    %cst_5 = arith.constant 0.000000e+00 : f32
    %6 = vector.broadcast %cst_5 : f32 to vector<32x32xf32>
    %7 = arith.cmpf ogt, %5, %6 : vector<32x32xf32>
    %cst_6 = arith.constant 2.000000e-01 : f32
    %8 = vector.broadcast %cst_6 : f32 to vector<32x32xf32>
    %9 = arith.mulf %8, %5 : vector<32x32xf32>
    %10 = arith.select %7, %5, %9 : vector<32x32xi1>, vector<32x32xf32>
    %c0_7 = arith.constant 0 : index
    %c0_8 = arith.constant 0 : index
    %11 = vector.load %arg4[%c0_7, %c0_8] : memref<32x1xf32, #tpu.memory_space<vmem>>, vector<32x1xf32>
    %12 = vector.broadcast %11 : vector<32x1xf32> to vector<32x32xf32>
    %13 = arith.mulf %10, %12 : vector<32x32xf32>
    %c0_9 = arith.constant 0 : index
    %c0_10 = arith.constant 0 : index
    %14 = vector.load %arg5[%c0_9, %c0_10] : memref<32x1xf32, #tpu.memory_space<vmem>>, vector<32x1xf32>
    %15 = vector.broadcast %14 : vector<32x1xf32> to vector<32x32xf32>
    %16 = arith.addf %13, %15 : vector<32x32xf32>
    %17 = arith.truncf %16 : vector<32x32xf32> to vector<32x32xbf16>
    %c0_11 = arith.constant 0 : index
    %c0_12 = arith.constant 0 : index
    %18 = vector.load %arg6[%c0_11, %c0_12] : memref<32x32xbf16, #tpu.memory_space<vmem>>, vector<32x32xbf16>
    tpu.vector_store %arg6[%c0_11, %c0_12], %17 {strides = array<i32>} : memref<32x32xbf16, #tpu.memory_space<vmem>>, vector<32x32xbf16>,
    return
  }
  func.func @transform_0(%arg0: i32) -> (i32, i32) {
    %c0_i32 = arith.constant 0 : i32
    %c0_i32_0 = arith.constant 0 : i32
    return %c0_i32, %arg0 : i32, i32
  }
  func.func @transform_1(%arg0: i32) -> (i32, i32) {
    %c0_i32 = arith.constant 0 : i32
    %c0_i32_0 = arith.constant 0 : i32
    %c0_i32_1 = arith.constant 0 : i32
    return %c0_i32, %c0_i32_0 : i32, i32
  }
  func.func @transform_2(%arg0: i32) -> (i32, i32) {
    %c0_i32 = arith.constant 0 : i32
    %c0_i32_0 = arith.constant 0 : i32
    %c0_i32_1 = arith.constant 0 : i32
    return %c0_i32, %c0_i32_0 : i32, i32
  }
  func.func @transform_3(%arg0: i32) -> (i32, i32) {
    %c0_i32 = arith.constant 0 : i32
    %c0_i32_0 = arith.constant 0 : i32
    %c0_i32_1 = arith.constant 0 : i32
    return %c0_i32, %c0_i32_0 : i32, i32
  }
  func.func @transform_4(%arg0: i32) -> (i32, i32) {
    %c0_i32 = arith.constant 0 : i32
    %c0_i32_0 = arith.constant 0 : i32
    %c0_i32_1 = arith.constant 0 : i32
    return %c0_i32, %c0_i32_0 : i32, i32
  }
  func.func @transform_5(%arg0: i32) -> (i32, i32) {
    %c0_i32 = arith.constant 0 : i32
    %c0_i32_0 = arith.constant 0 : i32
    return %c0_i32, %arg0 : i32, i32
  }
}

module attributes {stable_mosaic.version = 11 : i64} {
  func.func @fused_conv_kernel(%arg0: i32, %arg1: memref<288x8xbf16, #tpu.memory_space<vmem>>, %arg2: memref<64x288xbf16, #tpu.memory_space<vmem>>, %arg3: memref<64x1xf32, #tpu.memory_space<vmem>>, %arg4: memref<64x1xf32, #tpu.memory_space<vmem>>, %arg5: memref<64x1xf32, #tpu.memory_space<vmem>>, %arg6: memref<64x8xbf16, #tpu.memory_space<vmem>>) attributes {dimension_semantics = [#tpu.dimension_semantics<parallel>], iteration_bounds = array<i64: 1>, scalar_prefetch = 0 : i64, scratch_operands = 0 : i64, tpu.core_type = #tpu.core_type<tc>, window_params = [{transform_indices = @transform_0, window_bounds = array<i64: 288, 8>}, {pipeline_mode = #tpu.pipeline_mode<synchronous>, transform_indices = @transform_1, window_bounds = array<i64: 64, 288>}, {pipeline_mode = #tpu.pipeline_mode<synchronous>, transform_indices = @transform_2, window_bounds = array<i64: 64, 1>}, {pipeline_mode = #tpu.pipeline_mode<synchronous>, transform_indices = @transform_3, window_bounds = array<i64: 64, 1>}, {pipeline_mode = #tpu.pipeline_mode<synchronous>, transform_indices = @transform_4, window_bounds = array<i64: 64, 1>}, {transform_indices = @transform_5, window_bounds = array<i64: 64, 8>}]} {
    %c0 = arith.constant 0 : index
    %c0_0 = arith.constant 0 : index
    %0 = vector.load %arg2[%c0, %c0_0] : memref<64x288xbf16, #tpu.memory_space<vmem>>, vector<64x288xbf16>
    %c0_1 = arith.constant 0 : index
    %c0_2 = arith.constant 0 : index
    %1 = vector.load %arg1[%c0_1, %c0_2] : memref<288x8xbf16, #tpu.memory_space<vmem>>, vector<288x8xbf16>
    %cst = arith.constant dense<0.000000e+00> : vector<64x8xf32>
    %2 = tpu.matmul %0, %1, %cst {dimension_numbers = #tpu.dot_dimension_numbers<[1], [0], [0], [1], [0, 0, 1, 1], [], []>} : vector<64x288xbf16>, vector<288x8xbf16>, vector<64x8xf32> -> vector<64x8xf32>
    %c0_3 = arith.constant 0 : index
    %c0_4 = arith.constant 0 : index
    %3 = vector.load %arg3[%c0_3, %c0_4] : memref<64x1xf32, #tpu.memory_space<vmem>>, vector<64x1xf32>
    %4 = vector.broadcast %3 : vector<64x1xf32> to vector<64x8xf32>
    %5 = arith.addf %2, %4 : vector<64x8xf32>
    %cst_5 = arith.constant 0.000000e+00 : f32
    %6 = vector.broadcast %cst_5 : f32 to vector<64x8xf32>
    %7 = arith.cmpf ogt, %5, %6 : vector<64x8xf32>
    %cst_6 = arith.constant 2.000000e-01 : f32
    %8 = vector.broadcast %cst_6 : f32 to vector<64x8xf32>
    %9 = arith.mulf %8, %5 : vector<64x8xf32>
    %10 = arith.select %7, %5, %9 : vector<64x8xi1>, vector<64x8xf32>
    %c0_7 = arith.constant 0 : index
    %c0_8 = arith.constant 0 : index
    %11 = vector.load %arg4[%c0_7, %c0_8] : memref<64x1xf32, #tpu.memory_space<vmem>>, vector<64x1xf32>
    %12 = vector.broadcast %11 : vector<64x1xf32> to vector<64x8xf32>
    %13 = arith.mulf %10, %12 : vector<64x8xf32>
    %c0_9 = arith.constant 0 : index
    %c0_10 = arith.constant 0 : index
    %14 = vector.load %arg5[%c0_9, %c0_10] : memref<64x1xf32, #tpu.memory_space<vmem>>, vector<64x1xf32>
    %15 = vector.broadcast %14 : vector<64x1xf32> to vector<64x8xf32>
    %16 = arith.addf %13, %15 : vector<64x8xf32>
    %17 = arith.truncf %16 : vector<64x8xf32> to vector<64x8xbf16>
    %c0_11 = arith.constant 0 : index
    %c0_12 = arith.constant 0 : index
    %18 = vector.load %arg6[%c0_11, %c0_12] : memref<64x8xbf16, #tpu.memory_space<vmem>>, vector<64x8xbf16>
    tpu.vector_store %arg6[%c0_11, %c0_12], %17 {strides = array<i32>} : memref<64x8xbf16, #tpu.memory_space<vmem>>, vector<64x8xbf16>,
    return
  }
  func.func @transform_0(%arg0: i32) -> (i32, i32) {
    %c0_i32 = arith.constant 0 : i32
    %c0_i32_0 = arith.constant 0 : i32
    return %c0_i32, %arg0 : i32, i32
  }
  func.func @transform_1(%arg0: i32) -> (i32, i32) {
    %c0_i32 = arith.constant 0 : i32
    %c0_i32_0 = arith.constant 0 : i32
    %c0_i32_1 = arith.constant 0 : i32
    return %c0_i32, %c0_i32_0 : i32, i32
  }
  func.func @transform_2(%arg0: i32) -> (i32, i32) {
    %c0_i32 = arith.constant 0 : i32
    %c0_i32_0 = arith.constant 0 : i32
    %c0_i32_1 = arith.constant 0 : i32
    return %c0_i32, %c0_i32_0 : i32, i32
  }
  func.func @transform_3(%arg0: i32) -> (i32, i32) {
    %c0_i32 = arith.constant 0 : i32
    %c0_i32_0 = arith.constant 0 : i32
    %c0_i32_1 = arith.constant 0 : i32
    return %c0_i32, %c0_i32_0 : i32, i32
  }
  func.func @transform_4(%arg0: i32) -> (i32, i32) {
    %c0_i32 = arith.constant 0 : i32
    %c0_i32_0 = arith.constant 0 : i32
    %c0_i32_1 = arith.constant 0 : i32
    return %c0_i32, %c0_i32_0 : i32, i32
  }
  func.func @transform_5(%arg0: i32) -> (i32, i32) {
    %c0_i32 = arith.constant 0 : i32
    %c0_i32_0 = arith.constant 0 : i32
    return %c0_i32, %arg0 : i32, i32
  }
}

module attributes {stable_mosaic.version = 11 : i64} {
  func.func @fused_conv_kernel(%arg0: i32, %arg1: memref<576x2xbf16, #tpu.memory_space<vmem>>, %arg2: memref<128x576xbf16, #tpu.memory_space<vmem>>, %arg3: memref<128x1xf32, #tpu.memory_space<vmem>>, %arg4: memref<128x1xf32, #tpu.memory_space<vmem>>, %arg5: memref<128x1xf32, #tpu.memory_space<vmem>>, %arg6: memref<128x2xbf16, #tpu.memory_space<vmem>>) attributes {dimension_semantics = [#tpu.dimension_semantics<parallel>], iteration_bounds = array<i64: 1>, scalar_prefetch = 0 : i64, scratch_operands = 0 : i64, tpu.core_type = #tpu.core_type<tc>, window_params = [{transform_indices = @transform_0, window_bounds = array<i64: 576, 2>}, {pipeline_mode = #tpu.pipeline_mode<synchronous>, transform_indices = @transform_1, window_bounds = array<i64: 128, 576>}, {pipeline_mode = #tpu.pipeline_mode<synchronous>, transform_indices = @transform_2, window_bounds = array<i64: 128, 1>}, {pipeline_mode = #tpu.pipeline_mode<synchronous>, transform_indices = @transform_3, window_bounds = array<i64: 128, 1>}, {pipeline_mode = #tpu.pipeline_mode<synchronous>, transform_indices = @transform_4, window_bounds = array<i64: 128, 1>}, {transform_indices = @transform_5, window_bounds = array<i64: 128, 2>}]} {
    %c0 = arith.constant 0 : index
    %c0_0 = arith.constant 0 : index
    %0 = vector.load %arg2[%c0, %c0_0] : memref<128x576xbf16, #tpu.memory_space<vmem>>, vector<128x576xbf16>
    %c0_1 = arith.constant 0 : index
    %c0_2 = arith.constant 0 : index
    %1 = vector.load %arg1[%c0_1, %c0_2] : memref<576x2xbf16, #tpu.memory_space<vmem>>, vector<576x2xbf16>
    %cst = arith.constant dense<0.000000e+00> : vector<128x2xf32>
    %2 = tpu.matmul %0, %1, %cst {dimension_numbers = #tpu.dot_dimension_numbers<[1], [0], [0], [1], [0, 0, 1, 1], [], []>} : vector<128x576xbf16>, vector<576x2xbf16>, vector<128x2xf32> -> vector<128x2xf32>
    %c0_3 = arith.constant 0 : index
    %c0_4 = arith.constant 0 : index
    %3 = vector.load %arg3[%c0_3, %c0_4] : memref<128x1xf32, #tpu.memory_space<vmem>>, vector<128x1xf32>
    %4 = vector.broadcast %3 : vector<128x1xf32> to vector<128x2xf32>
    %5 = arith.addf %2, %4 : vector<128x2xf32>
    %cst_5 = arith.constant 0.000000e+00 : f32
    %6 = vector.broadcast %cst_5 : f32 to vector<128x2xf32>
    %7 = arith.cmpf ogt, %5, %6 : vector<128x2xf32>
    %cst_6 = arith.constant 2.000000e-01 : f32
    %8 = vector.broadcast %cst_6 : f32 to vector<128x2xf32>
    %9 = arith.mulf %8, %5 : vector<128x2xf32>
    %10 = arith.select %7, %5, %9 : vector<128x2xi1>, vector<128x2xf32>
    %c0_7 = arith.constant 0 : index
    %c0_8 = arith.constant 0 : index
    %11 = vector.load %arg4[%c0_7, %c0_8] : memref<128x1xf32, #tpu.memory_space<vmem>>, vector<128x1xf32>
    %12 = vector.broadcast %11 : vector<128x1xf32> to vector<128x2xf32>
    %13 = arith.mulf %10, %12 : vector<128x2xf32>
    %c0_9 = arith.constant 0 : index
    %c0_10 = arith.constant 0 : index
    %14 = vector.load %arg5[%c0_9, %c0_10] : memref<128x1xf32, #tpu.memory_space<vmem>>, vector<128x1xf32>
    %15 = vector.broadcast %14 : vector<128x1xf32> to vector<128x2xf32>
    %16 = arith.addf %13, %15 : vector<128x2xf32>
    %17 = arith.truncf %16 : vector<128x2xf32> to vector<128x2xbf16>
    %c0_11 = arith.constant 0 : index
    %c0_12 = arith.constant 0 : index
    %18 = vector.load %arg6[%c0_11, %c0_12] : memref<128x2xbf16, #tpu.memory_space<vmem>>, vector<128x2xbf16>
    tpu.vector_store %arg6[%c0_11, %c0_12], %17 {strides = array<i32>} : memref<128x2xbf16, #tpu.memory_space<vmem>>, vector<128x2xbf16>,
    return
  }
  func.func @transform_0(%arg0: i32) -> (i32, i32) {
    %c0_i32 = arith.constant 0 : i32
    %c0_i32_0 = arith.constant 0 : i32
    return %c0_i32, %arg0 : i32, i32
  }
  func.func @transform_1(%arg0: i32) -> (i32, i32) {
    %c0_i32 = arith.constant 0 : i32
    %c0_i32_0 = arith.constant 0 : i32
    %c0_i32_1 = arith.constant 0 : i32
    return %c0_i32, %c0_i32_0 : i32, i32
  }
  func.func @transform_2(%arg0: i32) -> (i32, i32) {
    %c0_i32 = arith.constant 0 : i32
    %c0_i32_0 = arith.constant 0 : i32
    %c0_i32_1 = arith.constant 0 : i32
    return %c0_i32, %c0_i32_0 : i32, i32
  }
  func.func @transform_3(%arg0: i32) -> (i32, i32) {
    %c0_i32 = arith.constant 0 : i32
    %c0_i32_0 = arith.constant 0 : i32
    %c0_i32_1 = arith.constant 0 : i32
    return %c0_i32, %c0_i32_0 : i32, i32
  }
  func.func @transform_4(%arg0: i32) -> (i32, i32) {
    %c0_i32 = arith.constant 0 : i32
    %c0_i32_0 = arith.constant 0 : i32
    %c0_i32_1 = arith.constant 0 : i32
    return %c0_i32, %c0_i32_0 : i32, i32
  }
  func.func @transform_5(%arg0: i32) -> (i32, i32) {
    %c0_i32 = arith.constant 0 : i32
    %c0_i32_0 = arith.constant 0 : i32
    return %c0_i32, %arg0 : i32, i32
  }
}

module attributes {stable_mosaic.version = 11 : i64} {
  func.func @head_kernel(%arg0: i32, %arg1: memref<2x128xbf16, #tpu.memory_space<vmem>>, %arg2: memref<128x128xbf16, #tpu.memory_space<vmem>>, %arg3: memref<1x128xf32, #tpu.memory_space<vmem>>, %arg4: memref<2x128xf32, #tpu.memory_space<vmem>>, %arg5: memref<2x128xf32, #tpu.memory_space<vmem>>) attributes {dimension_semantics = [#tpu.dimension_semantics<arbitrary>], iteration_bounds = array<i64: 1>, scalar_prefetch = 0 : i64, scratch_operands = 1 : i64, tpu.core_type = #tpu.core_type<tc>, window_params = [{transform_indices = @transform_0, window_bounds = array<i64: 2, 128>}, {transform_indices = @transform_1, window_bounds = array<i64: 128, 128>}, {pipeline_mode = #tpu.pipeline_mode<synchronous>, transform_indices = @transform_2, window_bounds = array<i64: 1, 128>}, {pipeline_mode = #tpu.pipeline_mode<synchronous>, transform_indices = @transform_3, window_bounds = array<i64: 2, 128>}]} {
    %c0_i32 = arith.constant 0 : i32
    %0 = arith.cmpi eq, %arg0, %c0_i32 : i32
    %1 = arith.extui %0 : i1 to i32
    %c0_i32_0 = arith.constant 0 : i32
    %2 = arith.cmpi ne, %1, %c0_i32_0 : i32
    scf.if %2 {
      %cst_10 = arith.constant 0.000000e+00 : f32
      %12 = vector.broadcast %cst_10 : f32 to vector<2x128xf32>
      %c0_11 = arith.constant 0 : index
      %c0_12 = arith.constant 0 : index
      %13 = vector.load %arg5[%c0_11, %c0_12] : memref<2x128xf32, #tpu.memory_space<vmem>>, vector<2x128xf32>
      tpu.vector_store %arg5[%c0_11, %c0_12], %12 {strides = array<i32>} : memref<2x128xf32, #tpu.memory_space<vmem>>, vector<2x128xf32>,
    } else {
    }
    %c0 = arith.constant 0 : index
    %c0_1 = arith.constant 0 : index
    %3 = vector.load %arg5[%c0, %c0_1] : memref<2x128xf32, #tpu.memory_space<vmem>>, vector<2x128xf32>
    %c0_2 = arith.constant 0 : index
    %c0_3 = arith.constant 0 : index
    %4 = vector.load %arg1[%c0_2, %c0_3] : memref<2x128xbf16, #tpu.memory_space<vmem>>, vector<2x128xbf16>
    %c0_4 = arith.constant 0 : index
    %c0_5 = arith.constant 0 : index
    %5 = vector.load %arg2[%c0_4, %c0_5] : memref<128x128xbf16, #tpu.memory_space<vmem>>, vector<128x128xbf16>
    %cst = arith.constant dense<0.000000e+00> : vector<2x128xf32>
    %6 = tpu.matmul %4, %5, %cst {dimension_numbers = #tpu.dot_dimension_numbers<[1], [0], [0], [1], [0, 0, 1, 1], [], []>} : vector<2x128xbf16>, vector<128x128xbf16>, vector<2x128xf32> -> vector<2x128xf32>
    %7 = arith.addf %3, %6 : vector<2x128xf32>
    %c0_6 = arith.constant 0 : index
    %c0_7 = arith.constant 0 : index
    %8 = vector.load %arg5[%c0_6, %c0_7] : memref<2x128xf32, #tpu.memory_space<vmem>>, vector<2x128xf32>
    tpu.vector_store %arg5[%c0_6, %c0_7], %7 {strides = array<i32>} : memref<2x128xf32, #tpu.memory_space<vmem>>, vector<2x128xf32>,
    %c0_i32_8 = arith.constant 0 : i32
    %9 = arith.cmpi eq, %arg0, %c0_i32_8 : i32
    %10 = arith.extui %9 : i1 to i32
    %c0_i32_9 = arith.constant 0 : i32
    %11 = arith.cmpi ne, %10, %c0_i32_9 : i32
    scf.if %11 {
      %c0_10 = arith.constant 0 : index
      %c0_11 = arith.constant 0 : index
      %12 = vector.load %arg5[%c0_10, %c0_11] : memref<2x128xf32, #tpu.memory_space<vmem>>, vector<2x128xf32>
      %c0_12 = arith.constant 0 : index
      %c0_13 = arith.constant 0 : index
      %13 = vector.load %arg3[%c0_12, %c0_13] : memref<1x128xf32, #tpu.memory_space<vmem>>, vector<1x128xf32>
      %14 = vector.broadcast %13 : vector<1x128xf32> to vector<2x128xf32>
      %15 = arith.addf %12, %14 : vector<2x128xf32>
      %cst_14 = arith.constant 0.000000e+00 : f32
      %16 = vector.broadcast %cst_14 : f32 to vector<2x128xf32>
      %17 = arith.subf %16, %15 : vector<2x128xf32>
      %18 = math.exp %17 : vector<2x128xf32>
      %cst_15 = arith.constant 1.000000e+00 : f32
      %19 = vector.broadcast %cst_15 : f32 to vector<2x128xf32>
      %20 = arith.addf %19, %18 : vector<2x128xf32>
      %cst_16 = arith.constant 1.000000e+00 : f32
      %21 = vector.broadcast %cst_16 : f32 to vector<2x128xf32>
      %22 = arith.divf %21, %20 : vector<2x128xf32>
      %c0_17 = arith.constant 0 : index
      %c0_18 = arith.constant 0 : index
      %23 = vector.load %arg4[%c0_17, %c0_18] : memref<2x128xf32, #tpu.memory_space<vmem>>, vector<2x128xf32>
      tpu.vector_store %arg4[%c0_17, %c0_18], %22 {strides = array<i32>} : memref<2x128xf32, #tpu.memory_space<vmem>>, vector<2x128xf32>,
    } else {
    }
    return
  }
  func.func @transform_0(%arg0: i32) -> (i32, i32) {
    %c0_i32 = arith.constant 0 : i32
    %c0_i32_0 = arith.constant 0 : i32
    return %c0_i32, %arg0 : i32, i32
  }
  func.func @transform_1(%arg0: i32) -> (i32, i32) {
    %c0_i32 = arith.constant 0 : i32
    %c0_i32_0 = arith.constant 0 : i32
    return %arg0, %c0_i32 : i32, i32
  }
  func.func @transform_2(%arg0: i32) -> (i32, i32) {
    %c0_i32 = arith.constant 0 : i32
    %c0_i32_0 = arith.constant 0 : i32
    %c0_i32_1 = arith.constant 0 : i32
    return %c0_i32, %c0_i32_0 : i32, i32
  }
  func.func @transform_3(%arg0: i32) -> (i32, i32) {
    %c0_i32 = arith.constant 0 : i32
    %c0_i32_0 = arith.constant 0 : i32
    %c0_i32_1 = arith.constant 0 : i32
    return %c0_i32, %c0_i32_0 : i32, i32
  }
}

</mosaic_0001>

<llo_original>
// kernel: discriminator_forward.5
$region0: #{discriminator_forward.5}
  #allocation0 [shape = 'u32[]', space=smem, size = 0x4, offset = 0x4, fixed_abs, tag = 'smem constant byte address 0x4 - core index']
  #allocation1 [shape = 'u32[144,128]{1,0:T(1,128)}', space=vmem, size = 0x12000, scoped, tag = 'internal scratch']
  %s0 = inlined_call_operand.vmem [shape: bf16[36,128], index: 0, kind: input, shape index: {}]
  %s1 = inlined_call_operand.vmem [shape: bf16[16,36], index: 1, kind: input, shape index: {}]
  %s2 = inlined_call_operand.vmem [shape: f32[16,1], index: 2, kind: input, shape index: {}]
  %s3 = inlined_call_operand.vmem [shape: f32[16,1], index: 3, kind: input, shape index: {}]
  %s4 = inlined_call_operand.vmem [shape: f32[16,1], index: 4, kind: input, shape index: {}]
  %s5 = inlined_call_operand.vmem [shape: bf16[16,128], index: 5, kind: output, shape index: {}]
  %s6 = sld [smem:[#allocation0]]
  $region30: #{discriminator_forward.5} parent=0
    _
  %s8 = ssub.s32 1, %s6
  %s9 = scalar_select 0, %s8, %s6
  // Predicated region
  $region2: #{discriminator_forward.5} parent=0 // pred_check
    _
  $region3: #{discriminator_forward.5} parent=0 // pred_check_branch
    %11 = sbr.rel (0) target = $region5
  $region4: #{discriminator_forward.5} parent=0 // pred_region
    _
  $region5: #{discriminator_forward.5} parent=0 // pred_fallthru
    _
  // Predicated region
  $region6: #{discriminator_forward.5} parent=0 // pred_check
    _
  $region7: #{discriminator_forward.5} parent=0 // pred_check_branch
    %13 = sbr.rel (0) target = $region9
  $region8: #{discriminator_forward.5} parent=0 // pred_region
    _
  $region9: #{discriminator_forward.5} parent=0 // pred_fallthru
    _
  // Predicated region
  $region10: #{discriminator_forward.5} parent=0 // pred_check
    _
  $region11: #{discriminator_forward.5} parent=0 // pred_check_branch
    %15 = sbr.rel (0) target = $region13
  $region12: #{discriminator_forward.5} parent=0 // pred_region
    _
  $region13: #{discriminator_forward.5} parent=0 // pred_fallthru
    _
  // Predicated region
  $region14: #{discriminator_forward.5} parent=0 // pred_check
    _
  $region15: #{discriminator_forward.5} parent=0 // pred_check_branch
    %17 = sbr.rel (0) target = $region17
  $region16: #{discriminator_forward.5} parent=0 // pred_region
    _
  $region17: #{discriminator_forward.5} parent=0 // pred_fallthru
    _
  // Predicated region
  $region18: #{discriminator_forward.5} parent=0 // pred_check
    _
  $region19: #{discriminator_forward.5} parent=0 // pred_check_branch
    %19 = sbr.rel (0) target = $region21
  $region20: #{discriminator_forward.5} parent=0 // pred_region
    _
  $region21: #{discriminator_forward.5} parent=0 // pred_fallthru
    _
  %v21 = vld [vmem:[%s1] sm:$0xf]
  %v22 = vld [vmem:[%s1 + $0x4] sm:$0xf]
  %v23 = vld [vmem:[%s0] sm:$0xf]
  %v24 = vld [vmem:[%s0 + $0x4] sm:$0xf]
  %v25 = vld [vmem:[%s0 + $0x8] sm:$0xf]
  %v26 = vld [vmem:[%s0 + $0xc] sm:$0xf]
  %v27 = vld [vmem:[%s0 + $0x10] sm:$0x3]
  %v28 = vld [vmem:[%s2] sm:$0xff]
  %v29 = vld [vmem:[%s2 + $0x8] sm:$0xff]
  %31 = vset.pattern.permute.xlu0 0
  %32 = vperm.xlu0 %31, %v28
  %v33 = vpop.permute.xlu0 %32
  %36 = vset.pattern.permute.xlu0 0
  %37 = vperm.xlu0 %36, %v29
  %v38 = vpop.permute.xlu0 %37
  %v42 = vunpack.c.l.b16 %v21
  %v43 = vunpack.c.l.b16 %v22
  %v44 = vpack.c.b16 %v43, %v42
  %v50 = vunpack.c.l.b16 %v23
  %v51 = vunpack.c.l.b16 %v24
  %v52 = vunpack.c.l.b16 %v25
  %v53 = vunpack.c.l.b16 %v26
  %v54 = vunpack.c.l.b16 %v27
  %v55 = vpack.c.b16 %v51, %v50
  %v56 = vpack.c.b16 %v53, %v52
  %v57 = vpack.c.b16 %v54, %v54
  %vm60 = vcmask 293888
  %v62 = vsel %vm60, %v44, 0
  %vm64 = vcmask 1041408
  %v66 = vsel %vm64, %v57, 0
  %68 = vmatprep.subr.bf16.mxu0 0
  %69 = vmatpush1.bf16.msra.mxu0 0
  %70 = vmatprep.subr.bf16.mxu0 0
  %71 = vmatpush1.bf16.msra.mxu0 0
  %72 = vmatprep.subr.bf16.mxu0 0
  %73 = vmatpush1.bf16.msra.mxu0 0
  %74 = vmatprep.subr.bf16.mxu0 0
  %75 = vmatpush1.bf16.msra.mxu0 0
  %76 = vmatprep.subr.bf16.mxu0 0
  %77 = vmatpush1.bf16.msra.mxu0 0
  %78 = vmatprep.subr.bf16.mxu0 0
  %79 = vmatpush1.bf16.msra.mxu0 %v66
  %80 = vmatprep.subr.bf16.mxu0 0
  %81 = vmatpush1.bf16.msra.mxu0 %v56
  %82 = vmatprep.subr.bf16.mxu0 0
  %83 = vmatpush1.bf16.msra.mxu0 %v55
  %84 = vmatprep.subr.bf16.mxu0 0
  %85 = vmatpush2.bf16.msra.mxu0 0
  %86 = vmatprep.subr.bf16.mxu0 0
  %87 = vmatpush2.bf16.msra.mxu0 0
  %88 = vmatprep.subr.bf16.mxu0 0
  %89 = vmatpush2.bf16.msra.mxu0 0
  %90 = vmatprep.subr.bf16.mxu0 0
  %91 = vmatpush2.bf16.msra.mxu0 0
  %92 = vmatprep.subr.bf16.mxu0 0
  %93 = vmatpush2.bf16.msra.mxu0 0
  %94 = vmatprep.subr.bf16.mxu0 0
  %95 = vmatpush2.bf16.msra.mxu0 0
  %96 = vmatprep.subr.bf16.mxu0 0
  %97 = vmatpush2.bf16.msra.mxu0 0
  %98 = vmatprep.subr.bf16.mxu0 0
  %99 = vmatpush2.bf16.msra.mxu0 0
  %100 = vmatprep.mubr.bf16.mxu0 0
  %101 = vmatmul.mubr.bf16.gmra.mxu0 %v62
  %v102 = vpop.f32.mrf.mxu0
  %v103 = vadd.f32 %v33, %v102
  %v104 = vpop.f32.mrf.mxu0
  %v105 = vpop.f32.mrf.mxu0
  %v106 = vadd.f32 %v38, %v105
  %v107 = vpop.f32.mrf.mxu0
  %108 = vdwg.mxu0
  %vm109 = vcmp.gt.f32.partialorder %v103, 0.0
  %vm110 = vcmp.gt.f32.partialorder %v106, 0.0
  %v111 = vmul.f32 %v103, 0.2
  %v112 = vmul.f32 %v106, 0.2
  %v113 = vsel %vm109, %v103, %v111
  %v114 = vsel %vm110, %v106, %v112
  %v115 = vld [vmem:[%s3] sm:$0xff]
  %v116 = vld [vmem:[%s3 + $0x8] sm:$0xff]
  %118 = vset.pattern.permute.xlu0 0
  %119 = vperm.xlu0 %118, %v115
  %v120 = vpop.permute.xlu0 %119
  %123 = vset.pattern.permute.xlu0 0
  %124 = vperm.xlu0 %123, %v116
  %v125 = vpop.permute.xlu0 %124
  %v127 = vmul.f32 %v113, %v120
  %v128 = vmul.f32 %v114, %v125
  %v129 = vld [vmem:[%s4] sm:$0xff]
  %v130 = vld [vmem:[%s4 + $0x8] sm:$0xff]
  %132 = vset.pattern.permute.xlu0 0
  %133 = vperm.xlu0 %132, %v129
  %v134 = vpop.permute.xlu0 %133
  %137 = vset.pattern.permute.xlu0 0
  %138 = vperm.xlu0 %137, %v130
  %v139 = vpop.permute.xlu0 %138
  %v141 = vadd.f32 %v127, %v134
  %v142 = vadd.f32 %v128, %v139
  %v143 = vpack.c.bf16 %v142, %v141
  %v145 = vunpack.c.l.b16 %v143
  %v146 = vunpack.c.h.b16 %v143
  %v147 = vpack.c.b16 %v145, %v145
  %v148 = vpack.c.b16 %v146, %v146
  %151 = vst [vmem:[%s5] sm:$0xf] %v147
  %152 = vst [vmem:[%s5 + $0x4] sm:$0xf] %v148
  // Predicated region
  $region22: #{discriminator_forward.5} parent=0 // pred_check
    _
  $region23: #{discriminator_forward.5} parent=0 // pred_check_branch
    %154 = sbr.rel (0) target = $region25
  $region24: #{discriminator_forward.5} parent=0 // pred_region
    _
  $region25: #{discriminator_forward.5} parent=0 // pred_fallthru
    _
  // Predicated region
  $region26: #{discriminator_forward.5} parent=0 // pred_check
    _
  $region27: #{discriminator_forward.5} parent=0 // pred_check_branch
    %156 = sbr.rel (0) target = $region29
  $region28: #{discriminator_forward.5} parent=0 // pred_region
    _
  $region29: #{discriminator_forward.5} parent=0 // pred_fallthru
    _

// kernel: discriminator_forward.6
$region0: #{discriminator_forward.6}
  #allocation0 [shape = 'u32[]', space=smem, size = 0x4, offset = 0x4, fixed_abs, tag = 'smem constant byte address 0x4 - core index']
  #allocation1 [shape = 'u32[144,128]{1,0:T(1,128)}', space=vmem, size = 0x12000, scoped, tag = 'internal scratch']
  %s0 = inlined_call_operand.vmem [shape: bf16[144,32], index: 0, kind: input, shape index: {}]
  %s1 = inlined_call_operand.vmem [shape: bf16[32,144], index: 1, kind: input, shape index: {}]
  %s2 = inlined_call_operand.vmem [shape: f32[32,1], index: 2, kind: input, shape index: {}]
  %s3 = inlined_call_operand.vmem [shape: f32[32,1], index: 3, kind: input, shape index: {}]
  %s4 = inlined_call_operand.vmem [shape: f32[32,1], index: 4, kind: input, shape index: {}]
  %s5 = inlined_call_operand.vmem [shape: bf16[32,32], index: 5, kind: output, shape index: {}]
  %s6 = sld [smem:[#allocation0]]
  $region30: #{discriminator_forward.6} parent=0
    _
  %s8 = ssub.s32 1, %s6
  %s9 = scalar_select 0, %s8, %s6
  // Predicated region
  $region2: #{discriminator_forward.6} parent=0 // pred_check
    _
  $region3: #{discriminator_forward.6} parent=0 // pred_check_branch
    %11 = sbr.rel (0) target = $region5
  $region4: #{discriminator_forward.6} parent=0 // pred_region
    _
  $region5: #{discriminator_forward.6} parent=0 // pred_fallthru
    _
  // Predicated region
  $region6: #{discriminator_forward.6} parent=0 // pred_check
    _
  $region7: #{discriminator_forward.6} parent=0 // pred_check_branch
    %13 = sbr.rel (0) target = $region9
  $region8: #{discriminator_forward.6} parent=0 // pred_region
    _
  $region9: #{discriminator_forward.6} parent=0 // pred_fallthru
    _
  // Predicated region
  $region10: #{discriminator_forward.6} parent=0 // pred_check
    _
  $region11: #{discriminator_forward.6} parent=0 // pred_check_branch
    %15 = sbr.rel (0) target = $region13
  $region12: #{discriminator_forward.6} parent=0 // pred_region
    _
  $region13: #{discriminator_forward.6} parent=0 // pred_fallthru
    _
  // Predicated region
  $region14: #{discriminator_forward.6} parent=0 // pred_check
    _
  $region15: #{discriminator_forward.6} parent=0 // pred_check_branch
    %17 = sbr.rel (0) target = $region17
  $region16: #{discriminator_forward.6} parent=0 // pred_region
    _
  $region17: #{discriminator_forward.6} parent=0 // pred_fallthru
    _
  // Predicated region
  $region18: #{discriminator_forward.6} parent=0 // pred_check
    _
  $region19: #{discriminator_forward.6} parent=0 // pred_check_branch
    %19 = sbr.rel (0) target = $region21
  $region20: #{discriminator_forward.6} parent=0 // pred_region
    _
  $region21: #{discriminator_forward.6} parent=0 // pred_fallthru
    _
  %v21 = vld [vmem:[%s1] sm:$0xff]
  %v22 = vld [vmem:[%s1 + $0x8] sm:$0xff]
  %v23 = vld [vmem:[%s1 + $0x10] sm:$0xff]
  %v24 = vld [vmem:[%s1 + $0x18] sm:$0xff]
  %v25 = vld [vmem:[%s0] sm:$0xf]
  %v26 = vld [vmem:[%s0 + $0x4] sm:$0xf]
  %v27 = vld [vmem:[%s0 + $0x8] sm:$0xf]
  %v28 = vld [vmem:[%s0 + $0xc] sm:$0xf]
  %v29 = vld [vmem:[%s0 + $0x10] sm:$0xf]
  %v30 = vld [vmem:[%s0 + $0x14] sm:$0xf]
  %v31 = vld [vmem:[%s0 + $0x18] sm:$0xf]
  %v32 = vld [vmem:[%s0 + $0x1c] sm:$0xf]
  %v33 = vld [vmem:[%s0 + $0x20] sm:$0xf]
  %v34 = vld [vmem:[%s0 + $0x24] sm:$0xf]
  %v35 = vld [vmem:[%s0 + $0x28] sm:$0xf]
  %v36 = vld [vmem:[%s0 + $0x2c] sm:$0xf]
  %v37 = vld [vmem:[%s0 + $0x30] sm:$0xf]
  %v38 = vld [vmem:[%s0 + $0x34] sm:$0xf]
  %v39 = vld [vmem:[%s0 + $0x38] sm:$0xf]
  %v40 = vld [vmem:[%s0 + $0x3c] sm:$0xf]
  %v41 = vld [vmem:[%s0 + $0x40] sm:$0xf]
  %v42 = vld [vmem:[%s0 + $0x44] sm:$0xf]
  %v43 = vld [vmem:[%s2] sm:$0xff]
  %v44 = vld [vmem:[%s2 + $0x8] sm:$0xff]
  %v45 = vld [vmem:[%s2 + $0x10] sm:$0xff]
  %v46 = vld [vmem:[%s2 + $0x18] sm:$0xff]
  %48 = vset.pattern.permute.xlu0 0
  %49 = vperm.xlu0 %48, %v43
  %v50 = vpop.permute.xlu0 %49
  %53 = vset.pattern.permute.xlu0 0
  %54 = vperm.xlu0 %53, %v44
  %v55 = vpop.permute.xlu0 %54
  %58 = vset.pattern.permute.xlu0 0
  %59 = vperm.xlu0 %58, %v45
  %v60 = vpop.permute.xlu0 %59
  %63 = vset.pattern.permute.xlu0 0
  %64 = vperm.xlu0 %63, %v46
  %v65 = vpop.permute.xlu0 %64
  %v71 = vunpack.c.l.b16 %v21
  %v72 = vunpack.c.h.b16 %v21
  %v73 = vunpack.c.l.b16 %v22
  %v74 = vunpack.c.h.b16 %v22
  %v75 = vunpack.c.l.b16 %v23
  %v76 = vunpack.c.h.b16 %v23
  %v77 = vunpack.c.l.b16 %v24
  %v78 = vunpack.c.h.b16 %v24
  %v79 = vpack.c.b16 %v73, %v71
  %v80 = vpack.c.b16 %v74, %v72
  %v81 = vpack.c.b16 %v77, %v75
  %v82 = vpack.c.b16 %v78, %v76
  %v103 = vunpack.c.l.b16 %v25
  %v104 = vunpack.c.l.b16 %v26
  %v105 = vunpack.c.l.b16 %v27
  %v106 = vunpack.c.l.b16 %v28
  %v107 = vunpack.c.l.b16 %v29
  %v108 = vunpack.c.l.b16 %v30
  %v109 = vunpack.c.l.b16 %v31
  %v110 = vunpack.c.l.b16 %v32
  %v111 = vunpack.c.l.b16 %v33
  %v112 = vunpack.c.l.b16 %v34
  %v113 = vunpack.c.l.b16 %v35
  %v114 = vunpack.c.l.b16 %v36
  %v115 = vunpack.c.l.b16 %v37
  %v116 = vunpack.c.l.b16 %v38
  %v117 = vunpack.c.l.b16 %v39
  %v118 = vunpack.c.l.b16 %v40
  %v119 = vunpack.c.l.b16 %v41
  %v120 = vunpack.c.l.b16 %v42
  %v121 = vpack.c.b16 %v104, %v103
  %v122 = vpack.c.b16 %v106, %v105
  %v123 = vpack.c.b16 %v108, %v107
  %v124 = vpack.c.b16 %v110, %v109
  %v125 = vpack.c.b16 %v112, %v111
  %v126 = vpack.c.b16 %v114, %v113
  %v127 = vpack.c.b16 %v116, %v115
  %v128 = vpack.c.b16 %v118, %v117
  %v129 = vpack.c.b16 %v120, %v119
  %vm139 = vcmask 130048
  %v141 = vsel %vm139, %v80, 0
  %v144 = vsel %vm139, %v82, 0
  %146 = vmatprep.subr.bf16.mxu0 0
  %147 = vmatpush1.bf16.msra.mxu0 %v128
  %148 = vmatprep.subr.bf16.mxu0 0
  %149 = vmatpush1.bf16.msra.mxu0 %v127
  %150 = vmatprep.subr.bf16.mxu0 0
  %151 = vmatpush1.bf16.msra.mxu0 %v126
  %152 = vmatprep.subr.bf16.mxu0 0
  %153 = vmatpush1.bf16.msra.mxu0 %v125
  %154 = vmatprep.subr.bf16.mxu0 0
  %155 = vmatpush1.bf16.msra.mxu0 %v124
  %156 = vmatprep.subr.bf16.mxu0 0
  %157 = vmatpush1.bf16.msra.mxu0 %v123
  %158 = vmatprep.subr.bf16.mxu0 0
  %159 = vmatpush1.bf16.msra.mxu0 %v122
  %160 = vmatprep.subr.bf16.mxu0 0
  %161 = vmatpush1.bf16.msra.mxu0 %v121
  %162 = vmatprep.subr.bf16.mxu0 0
  %163 = vmatpush2.bf16.msra.mxu0 0
  %164 = vmatprep.subr.bf16.mxu0 0
  %165 = vmatpush2.bf16.msra.mxu0 0
  %166 = vmatprep.subr.bf16.mxu0 0
  %167 = vmatpush2.bf16.msra.mxu0 0
  %168 = vmatprep.subr.bf16.mxu0 0
  %169 = vmatpush2.bf16.msra.mxu0 0
  %170 = vmatprep.subr.bf16.mxu0 0
  %171 = vmatpush2.bf16.msra.mxu0 0
  %172 = vmatprep.subr.bf16.mxu0 0
  %173 = vmatpush2.bf16.msra.mxu0 0
  %174 = vmatprep.subr.bf16.mxu0 0
  %175 = vmatpush2.bf16.msra.mxu0 0
  %176 = vmatprep.subr.bf16.mxu0 0
  %177 = vmatpush2.bf16.msra.mxu0 %v129
  %178 = vmatprep.mubr.bf16.mxu0 %v141
  %179 = vmatmul.mubr.bf16.gmra.mxu0 %v79
  %v180 = vpop.f32.mrf.mxu0
  %v181 = vadd.f32 %v50, %v180
  %v182 = vpop.f32.mrf.mxu0
  %v183 = vpop.f32.mrf.mxu0
  %v184 = vadd.f32 %v55, %v183
  %v185 = vpop.f32.mrf.mxu0
  %186 = vmatprep.mubr.bf16.mxu0 %v144
  %187 = vmatmul.mubr.bf16.gmra.mxu0 %v81
  %v188 = vpop.f32.mrf.mxu0
  %v189 = vadd.f32 %v60, %v188
  %v190 = vpop.f32.mrf.mxu0
  %v191 = vpop.f32.mrf.mxu0
  %v192 = vadd.f32 %v65, %v191
  %v193 = vpop.f32.mrf.mxu0
  %194 = vdwg.mxu0
  %vm195 = vcmp.gt.f32.partialorder %v181, 0.0
  %vm196 = vcmp.gt.f32.partialorder %v184, 0.0
  %vm197 = vcmp.gt.f32.partialorder %v189, 0.0
  %vm198 = vcmp.gt.f32.partialorder %v192, 0.0
  %v199 = vmul.f32 %v181, 0.2
  %v200 = vmul.f32 %v184, 0.2
  %v201 = vmul.f32 %v189, 0.2
  %v202 = vmul.f32 %v192, 0.2
  %v203 = vsel %vm195, %v181, %v199
  %v204 = vsel %vm196, %v184, %v200
  %v205 = vsel %vm197, %v189, %v201
  %v206 = vsel %vm198, %v192, %v202
  %v207 = vld [vmem:[%s3] sm:$0xff]
  %v208 = vld [vmem:[%s3 + $0x8] sm:$0xff]
  %v209 = vld [vmem:[%s3 + $0x10] sm:$0xff]
  %v210 = vld [vmem:[%s3 + $0x18] sm:$0xff]
  %212 = vset.pattern.permute.xlu0 0
  %213 = vperm.xlu0 %212, %v207
  %v214 = vpop.permute.xlu0 %213
  %217 = vset.pattern.permute.xlu0 0
  %218 = vperm.xlu0 %217, %v208
  %v219 = vpop.permute.xlu0 %218
  %222 = vset.pattern.permute.xlu0 0
  %223 = vperm.xlu0 %222, %v209
  %v224 = vpop.permute.xlu0 %223
  %227 = vset.pattern.permute.xlu0 0
  %228 = vperm.xlu0 %227, %v210
  %v229 = vpop.permute.xlu0 %228
  %v231 = vmul.f32 %v203, %v214
  %v232 = vmul.f32 %v204, %v219
  %v233 = vmul.f32 %v205, %v224
  %v234 = vmul.f32 %v206, %v229
  %v235 = vld [vmem:[%s4] sm:$0xff]
  %v236 = vld [vmem:[%s4 + $0x8] sm:$0xff]
  %v237 = vld [vmem:[%s4 + $0x10] sm:$0xff]
  %v238 = vld [vmem:[%s4 + $0x18] sm:$0xff]
  %240 = vset.pattern.permute.xlu0 0
  %241 = vperm.xlu0 %240, %v235
  %v242 = vpop.permute.xlu0 %241
  %245 = vset.pattern.permute.xlu0 0
  %246 = vperm.xlu0 %245, %v236
  %v247 = vpop.permute.xlu0 %246
  %250 = vset.pattern.permute.xlu0 0
  %251 = vperm.xlu0 %250, %v237
  %v252 = vpop.permute.xlu0 %251
  %255 = vset.pattern.permute.xlu0 0
  %256 = vperm.xlu0 %255, %v238
  %v257 = vpop.permute.xlu0 %256
  %v259 = vadd.f32 %v231, %v242
  %v260 = vadd.f32 %v232, %v247
  %v261 = vadd.f32 %v233, %v252
  %v262 = vadd.f32 %v234, %v257
  %v263 = vpack.c.bf16 %v260, %v259
  %v264 = vpack.c.bf16 %v262, %v261
  %v267 = vunpack.c.l.b16 %v263
  %v268 = vunpack.c.h.b16 %v263
  %v269 = vunpack.c.l.b16 %v264
  %v270 = vunpack.c.h.b16 %v264
  %v271 = vpack.c.b16 %v267, %v267
  %v272 = vpack.c.b16 %v268, %v268
  %v273 = vpack.c.b16 %v269, %v269
  %v274 = vpack.c.b16 %v270, %v270
  %vm279 = vcmask 257024
  %280 = vst.msk [vmem:[%s5] sm:$0xf] %vm279, %v271
  %281 = vst.msk [vmem:[%s5 + $0x4] sm:$0xf] %vm279, %v272
  %282 = vst.msk [vmem:[%s5 + $0x8] sm:$0xf] %vm279, %v273
  %283 = vst.msk [vmem:[%s5 + $0xc] sm:$0xf] %vm279, %v274
  // Predicated region
  $region22: #{discriminator_forward.6} parent=0 // pred_check
    _
  $region23: #{discriminator_forward.6} parent=0 // pred_check_branch
    %285 = sbr.rel (0) target = $region25
  $region24: #{discriminator_forward.6} parent=0 // pred_region
    _
  $region25: #{discriminator_forward.6} parent=0 // pred_fallthru
    _
  // Predicated region
  $region26: #{discriminator_forward.6} parent=0 // pred_check
    _
  $region27: #{discriminator_forward.6} parent=0 // pred_check_branch
    %287 = sbr.rel (0) target = $region29
  $region28: #{discriminator_forward.6} parent=0 // pred_region
    _
  $region29: #{discriminator_forward.6} parent=0 // pred_fallthru
    _

// kernel: discriminator_forward.7
$region0: #{discriminator_forward.7}
  #allocation0 [shape = 'u32[]', space=smem, size = 0x4, offset = 0x4, fixed_abs, tag = 'smem constant byte address 0x4 - core index']
  #allocation1 [shape = 'u32[144,128]{1,0:T(1,128)}', space=vmem, size = 0x12000, scoped, tag = 'internal scratch']
  %s0 = inlined_call_operand.vmem [shape: bf16[288,8], index: 0, kind: input, shape index: {}]
  %s1 = inlined_call_operand.vmem [shape: bf16[64,288], index: 1, kind: input, shape index: {}]
  %s2 = inlined_call_operand.vmem [shape: f32[64,1], index: 2, kind: input, shape index: {}]
  %s3 = inlined_call_operand.vmem [shape: f32[64,1], index: 3, kind: input, shape index: {}]
  %s4 = inlined_call_operand.vmem [shape: f32[64,1], index: 4, kind: input, shape index: {}]
  %s5 = inlined_call_operand.vmem [shape: bf16[64,8], index: 5, kind: output, shape index: {}]
  %s6 = sld [smem:[#allocation0]]
  $region30: #{discriminator_forward.7} parent=0
    _
  %s8 = ssub.s32 1, %s6
  %s9 = scalar_select 0, %s8, %s6
  // Predicated region
  $region2: #{discriminator_forward.7} parent=0 // pred_check
    _
  $region3: #{discriminator_forward.7} parent=0 // pred_check_branch
    %11 = sbr.rel (0) target = $region5
  $region4: #{discriminator_forward.7} parent=0 // pred_region
    _
  $region5: #{discriminator_forward.7} parent=0 // pred_fallthru
    _
  // Predicated region
  $region6: #{discriminator_forward.7} parent=0 // pred_check
    _
  $region7: #{discriminator_forward.7} parent=0 // pred_check_branch
    %13 = sbr.rel (0) target = $region9
  $region8: #{discriminator_forward.7} parent=0 // pred_region
    _
  $region9: #{discriminator_forward.7} parent=0 // pred_fallthru
    _
  // Predicated region
  $region10: #{discriminator_forward.7} parent=0 // pred_check
    _
  $region11: #{discriminator_forward.7} parent=0 // pred_check_branch
    %15 = sbr.rel (0) target = $region13
  $region12: #{discriminator_forward.7} parent=0 // pred_region
    _
  $region13: #{discriminator_forward.7} parent=0 // pred_fallthru
    _
  // Predicated region
  $region14: #{discriminator_forward.7} parent=0 // pred_check
    _
  $region15: #{discriminator_forward.7} parent=0 // pred_check_branch
    %17 = sbr.rel (0) target = $region17
  $region16: #{discriminator_forward.7} parent=0 // pred_region
    _
  $region17: #{discriminator_forward.7} parent=0 // pred_fallthru
    _
  // Predicated region
  $region18: #{discriminator_forward.7} parent=0 // pred_check
    _
  $region19: #{discriminator_forward.7} parent=0 // pred_check_branch
    %19 = sbr.rel (0) target = $region21
  $region20: #{discriminator_forward.7} parent=0 // pred_region
    _
  $region21: #{discriminator_forward.7} parent=0 // pred_fallthru
    _
  %v21 = vld [vmem:[%s1] sm:$0xff]
  %v22 = vld [vmem:[%s1 + $0x8] sm:$0xf]
  %v23 = vld [vmem:[%s1 + $0xc] sm:$0xff]
  %v24 = vld [vmem:[%s1 + $0x14] sm:$0xf]
  %v25 = vld [vmem:[%s1 + $0x18] sm:$0xff]
  %v26 = vld [vmem:[%s1 + $0x20] sm:$0xf]
  %v27 = vld [vmem:[%s1 + $0x24] sm:$0xff]
  %v28 = vld [vmem:[%s1 + $0x2c] sm:$0xf]
  %v29 = vld [vmem:[%s1 + $0x30] sm:$0xff]
  %v30 = vld [vmem:[%s1 + $0x38] sm:$0xf]
  %v31 = vld [vmem:[%s1 + $0x3c] sm:$0xff]
  %v32 = vld [vmem:[%s1 + $0x44] sm:$0xf]
  %v33 = vld [vmem:[%s1 + $0x48] sm:$0xff]
  %v34 = vld [vmem:[%s1 + $0x50] sm:$0xf]
  %v35 = vld [vmem:[%s1 + $0x54] sm:$0xff]
  %v36 = vld [vmem:[%s1 + $0x5c] sm:$0xf]
  %v37 = vld [vmem:[%s0] sm:$0xf]
  %v38 = vld [vmem:[%s0 + $0x4] sm:$0xf]
  %v39 = vld [vmem:[%s0 + $0x8] sm:$0xf]
  %v40 = vld [vmem:[%s0 + $0xc] sm:$0xf]
  %v41 = vld [vmem:[%s0 + $0x10] sm:$0xf]
  %v42 = vld [vmem:[%s0 + $0x14] sm:$0xf]
  %v43 = vld [vmem:[%s0 + $0x18] sm:$0xf]
  %v44 = vld [vmem:[%s0 + $0x1c] sm:$0xf]
  %v45 = vld [vmem:[%s0 + $0x20] sm:$0xf]
  %v46 = vld [vmem:[%s0 + $0x24] sm:$0xf]
  %v47 = vld [vmem:[%s0 + $0x28] sm:$0xf]
  %v48 = vld [vmem:[%s0 + $0x2c] sm:$0xf]
  %v49 = vld [vmem:[%s0 + $0x30] sm:$0xf]
  %v50 = vld [vmem:[%s0 + $0x34] sm:$0xf]
  %v51 = vld [vmem:[%s0 + $0x38] sm:$0xf]
  %v52 = vld [vmem:[%s0 + $0x3c] sm:$0xf]
  %v53 = vld [vmem:[%s0 + $0x40] sm:$0xf]
  %v54 = vld [vmem:[%s0 + $0x44] sm:$0xf]
  %v55 = vld [vmem:[%s0 + $0x48] sm:$0xf]
  %v56 = vld [vmem:[%s0 + $0x4c] sm:$0xf]
  %v57 = vld [vmem:[%s0 + $0x50] sm:$0xf]
  %v58 = vld [vmem:[%s0 + $0x54] sm:$0xf]
  %v59 = vld [vmem:[%s0 + $0x58] sm:$0xf]
  %v60 = vld [vmem:[%s0 + $0x5c] sm:$0xf]
  %v61 = vld [vmem:[%s0 + $0x60] sm:$0xf]
  %v62 = vld [vmem:[%s0 + $0x64] sm:$0xf]
  %v63 = vld [vmem:[%s0 + $0x68] sm:$0xf]
  %v64 = vld [vmem:[%s0 + $0x6c] sm:$0xf]
  %v65 = vld [vmem:[%s0 + $0x70] sm:$0xf]
  %v66 = vld [vmem:[%s0 + $0x74] sm:$0xf]
  %v67 = vld [vmem:[%s0 + $0x78] sm:$0xf]
  %v68 = vld [vmem:[%s0 + $0x7c] sm:$0xf]
  %v69 = vld [vmem:[%s0 + $0x80] sm:$0xf]
  %v70 = vld [vmem:[%s0 + $0x84] sm:$0xf]
  %v71 = vld [vmem:[%s0 + $0x88] sm:$0xf]
  %v72 = vld [vmem:[%s0 + $0x8c] sm:$0xf]
  %v73 = vld [vmem:[%s2] sm:$0xff]
  %v74 = vld [vmem:[%s2 + $0x8] sm:$0xff]
  %v75 = vld [vmem:[%s2 + $0x10] sm:$0xff]
  %v76 = vld [vmem:[%s2 + $0x18] sm:$0xff]
  %v77 = vld [vmem:[%s2 + $0x20] sm:$0xff]
  %v78 = vld [vmem:[%s2 + $0x28] sm:$0xff]
  %v79 = vld [vmem:[%s2 + $0x30] sm:$0xff]
  %v80 = vld [vmem:[%s2 + $0x38] sm:$0xff]
  %82 = vset.pattern.permute.xlu0 0
  %83 = vperm.xlu0 %82, %v73
  %v84 = vpop.permute.xlu0 %83
  %87 = vset.pattern.permute.xlu0 0
  %88 = vperm.xlu0 %87, %v74
  %v89 = vpop.permute.xlu0 %88
  %92 = vset.pattern.permute.xlu0 0
  %93 = vperm.xlu0 %92, %v75
  %v94 = vpop.permute.xlu0 %93
  %97 = vset.pattern.permute.xlu0 0
  %98 = vperm.xlu0 %97, %v76
  %v99 = vpop.permute.xlu0 %98
  %102 = vset.pattern.permute.xlu0 0
  %103 = vperm.xlu0 %102, %v77
  %v104 = vpop.permute.xlu0 %103
  %107 = vset.pattern.permute.xlu0 0
  %108 = vperm.xlu0 %107, %v78
  %v109 = vpop.permute.xlu0 %108
  %112 = vset.pattern.permute.xlu0 0
  %113 = vperm.xlu0 %112, %v79
  %v114 = vpop.permute.xlu0 %113
  %117 = vset.pattern.permute.xlu0 0
  %118 = vperm.xlu0 %117, %v80
  %v119 = vpop.permute.xlu0 %118
  %v137 = vunpack.c.l.b16 %v21
  %v138 = vunpack.c.h.b16 %v21
  %v139 = vunpack.c.l.b16 %v22
  %v140 = vunpack.c.l.b16 %v23
  %v141 = vunpack.c.h.b16 %v23
  %v142 = vunpack.c.l.b16 %v24
  %v143 = vunpack.c.l.b16 %v25
  %v144 = vunpack.c.h.b16 %v25
  %v145 = vunpack.c.l.b16 %v26
  %v146 = vunpack.c.l.b16 %v27
  %v147 = vunpack.c.h.b16 %v27
  %v148 = vunpack.c.l.b16 %v28
  %v149 = vunpack.c.l.b16 %v29
  %v150 = vunpack.c.h.b16 %v29
  %v151 = vunpack.c.l.b16 %v30
  %v152 = vunpack.c.l.b16 %v31
  %v153 = vunpack.c.h.b16 %v31
  %v154 = vunpack.c.l.b16 %v32
  %v155 = vunpack.c.l.b16 %v33
  %v156 = vunpack.c.h.b16 %v33
  %v157 = vunpack.c.l.b16 %v34
  %v158 = vunpack.c.l.b16 %v35
  %v159 = vunpack.c.h.b16 %v35
  %v160 = vunpack.c.l.b16 %v36
  %v161 = vpack.c.b16 %v140, %v137
  %v162 = vpack.c.b16 %v141, %v138
  %v163 = vpack.c.b16 %v142, %v139
  %v164 = vpack.c.b16 %v146, %v143
  %v165 = vpack.c.b16 %v147, %v144
  %v166 = vpack.c.b16 %v148, %v145
  %v167 = vpack.c.b16 %v152, %v149
  %v168 = vpack.c.b16 %v153, %v150
  %v169 = vpack.c.b16 %v154, %v151
  %v170 = vpack.c.b16 %v158, %v155
  %v171 = vpack.c.b16 %v159, %v156
  %v172 = vpack.c.b16 %v160, %v157
  %v217 = vunpack.c.l.b16 %v37
  %v218 = vunpack.c.l.b16 %v38
  %v219 = vunpack.c.l.b16 %v39
  %v220 = vunpack.c.l.b16 %v40
  %v221 = vunpack.c.l.b16 %v41
  %v222 = vunpack.c.l.b16 %v42
  %v223 = vunpack.c.l.b16 %v43
  %v224 = vunpack.c.l.b16 %v44
  %v225 = vunpack.c.l.b16 %v45
  %v226 = vunpack.c.l.b16 %v46
  %v227 = vunpack.c.l.b16 %v47
  %v228 = vunpack.c.l.b16 %v48
  %v229 = vunpack.c.l.b16 %v49
  %v230 = vunpack.c.l.b16 %v50
  %v231 = vunpack.c.l.b16 %v51
  %v232 = vunpack.c.l.b16 %v52
  %v233 = vunpack.c.l.b16 %v53
  %v234 = vunpack.c.l.b16 %v54
  %v235 = vunpack.c.l.b16 %v55
  %v236 = vunpack.c.l.b16 %v56
  %v237 = vunpack.c.l.b16 %v57
  %v238 = vunpack.c.l.b16 %v58
  %v239 = vunpack.c.l.b16 %v59
  %v240 = vunpack.c.l.b16 %v60
  %v241 = vunpack.c.l.b16 %v61
  %v242 = vunpack.c.l.b16 %v62
  %v243 = vunpack.c.l.b16 %v63
  %v244 = vunpack.c.l.b16 %v64
  %v245 = vunpack.c.l.b16 %v65
  %v246 = vunpack.c.l.b16 %v66
  %v247 = vunpack.c.l.b16 %v67
  %v248 = vunpack.c.l.b16 %v68
  %v249 = vunpack.c.l.b16 %v69
  %v250 = vunpack.c.l.b16 %v70
  %v251 = vunpack.c.l.b16 %v71
  %v252 = vunpack.c.l.b16 %v72
  %v253 = vpack.c.b16 %v218, %v217
  %v254 = vpack.c.b16 %v220, %v219
  %v255 = vpack.c.b16 %v222, %v221
  %v256 = vpack.c.b16 %v224, %v223
  %v257 = vpack.c.b16 %v226, %v225
  %v258 = vpack.c.b16 %v228, %v227
  %v259 = vpack.c.b16 %v230, %v229
  %v260 = vpack.c.b16 %v232, %v231
  %v261 = vpack.c.b16 %v234, %v233
  %v262 = vpack.c.b16 %v236, %v235
  %v263 = vpack.c.b16 %v238, %v237
  %v264 = vpack.c.b16 %v240, %v239
  %v265 = vpack.c.b16 %v242, %v241
  %v266 = vpack.c.b16 %v244, %v243
  %v267 = vpack.c.b16 %v246, %v245
  %v268 = vpack.c.b16 %v248, %v247
  %v269 = vpack.c.b16 %v250, %v249
  %v270 = vpack.c.b16 %v252, %v251
  %vm289 = vcmask 261120
  %v291 = vsel %vm289, %v163, 0
  %v294 = vsel %vm289, %v166, 0
  %v297 = vsel %vm289, %v169, 0
  %v300 = vsel %vm289, %v172, 0
  %302 = vmatprep.subr.bf16.mxu0 0
  %303 = vmatpush1.bf16.msra.mxu0 %v260
  %304 = vmatprep.subr.bf16.mxu0 0
  %305 = vmatpush1.bf16.msra.mxu0 %v259
  %306 = vmatprep.subr.bf16.mxu0 0
  %307 = vmatpush1.bf16.msra.mxu0 %v258
  %308 = vmatprep.subr.bf16.mxu0 0
  %309 = vmatpush1.bf16.msra.mxu0 %v257
  %310 = vmatprep.subr.bf16.mxu0 0
  %311 = vmatpush1.bf16.msra.mxu0 %v256
  %312 = vmatprep.subr.bf16.mxu0 0
  %313 = vmatpush1.bf16.msra.mxu0 %v255
  %314 = vmatprep.subr.bf16.mxu0 0
  %315 = vmatpush1.bf16.msra.mxu0 %v254
  %316 = vmatprep.subr.bf16.mxu0 0
  %317 = vmatpush1.bf16.msra.mxu0 %v253
  %318 = vmatprep.subr.bf16.mxu0 0
  %319 = vmatpush2.bf16.msra.mxu0 %v268
  %320 = vmatprep.subr.bf16.mxu0 0
  %321 = vmatpush2.bf16.msra.mxu0 %v267
  %322 = vmatprep.subr.bf16.mxu0 0
  %323 = vmatpush2.bf16.msra.mxu0 %v266
  %324 = vmatprep.subr.bf16.mxu0 0
  %325 = vmatpush2.bf16.msra.mxu0 %v265
  %326 = vmatprep.subr.bf16.mxu0 0
  %327 = vmatpush2.bf16.msra.mxu0 %v264
  %328 = vmatprep.subr.bf16.mxu0 0
  %329 = vmatpush2.bf16.msra.mxu0 %v263
  %330 = vmatprep.subr.bf16.mxu0 0
  %331 = vmatpush2.bf16.msra.mxu0 %v262
  %332 = vmatprep.subr.bf16.mxu0 0
  %333 = vmatpush2.bf16.msra.mxu0 %v261
  %334 = vmatprep.mubr.bf16.mxu0 %v162
  %335 = vmatmul.mubr.bf16.gmra.mxu0 %v161
  %v336 = vpop.f32.mrf.mxu0
  %v337 = vadd.f32 %v84, %v336
  %v338 = vpop.f32.mrf.mxu0
  %v339 = vpop.f32.mrf.mxu0
  %v340 = vadd.f32 %v89, %v339
  %v341 = vpop.f32.mrf.mxu0
  %342 = vmatprep.mubr.bf16.mxu0 %v165
  %343 = vmatmul.mubr.bf16.gmra.mxu0 %v164
  %v344 = vpop.f32.mrf.mxu0
  %v345 = vadd.f32 %v94, %v344
  %v346 = vpop.f32.mrf.mxu0
  %v347 = vpop.f32.mrf.mxu0
  %v348 = vadd.f32 %v99, %v347
  %v349 = vpop.f32.mrf.mxu0
  %350 = vmatprep.mubr.bf16.mxu0 %v168
  %351 = vmatmul.mubr.bf16.gmra.mxu0 %v167
  %v352 = vpop.f32.mrf.mxu0
  %v353 = vadd.f32 %v104, %v352
  %v354 = vpop.f32.mrf.mxu0
  %v355 = vpop.f32.mrf.mxu0
  %v356 = vadd.f32 %v109, %v355
  %v357 = vpop.f32.mrf.mxu0
  %358 = vmatprep.mubr.bf16.mxu0 %v171
  %359 = vmatmul.mubr.bf16.gmra.mxu0 %v170
  %v360 = vpop.f32.mrf.mxu0
  %v361 = vadd.f32 %v114, %v360
  %v362 = vpop.f32.mrf.mxu0
  %v363 = vpop.f32.mrf.mxu0
  %v364 = vadd.f32 %v119, %v363
  %v365 = vpop.f32.mrf.mxu0
  %366 = vdwg.mxu0
  %367 = vmatprep.subr.bf16.mxu0 0
  %368 = vmatpush1.bf16.msra.mxu0 0
  %369 = vmatprep.subr.bf16.mxu0 0
  %370 = vmatpush1.bf16.msra.mxu0 0
  %371 = vmatprep.subr.bf16.mxu0 0
  %372 = vmatpush1.bf16.msra.mxu0 0
  %373 = vmatprep.subr.bf16.mxu0 0
  %374 = vmatpush1.bf16.msra.mxu0 0
  %375 = vmatprep.subr.bf16.mxu0 0
  %376 = vmatpush1.bf16.msra.mxu0 0
  %377 = vmatprep.subr.bf16.mxu0 0
  %378 = vmatpush1.bf16.msra.mxu0 0
  %379 = vmatprep.subr.bf16.mxu0 0
  %380 = vmatpush1.bf16.msra.mxu0 %v270
  %381 = vmatprep.subr.bf16.mxu0 0
  %382 = vmatpush1.bf16.msra.mxu0 %v269
  %383 = vmatprep.subr.bf16.mxu0 0
  %384 = vmatpush2.bf16.msra.mxu0 0
  %385 = vmatprep.subr.bf16.mxu0 0
  %386 = vmatpush2.bf16.msra.mxu0 0
  %387 = vmatprep.subr.bf16.mxu0 0
  %388 = vmatpush2.bf16.msra.mxu0 0
  %389 = vmatprep.subr.bf16.mxu0 0
  %390 = vmatpush2.bf16.msra.mxu0 0
  %391 = vmatprep.subr.bf16.mxu0 0
  %392 = vmatpush2.bf16.msra.mxu0 0
  %393 = vmatprep.subr.bf16.mxu0 0
  %394 = vmatpush2.bf16.msra.mxu0 0
  %395 = vmatprep.subr.bf16.mxu0 0
  %396 = vmatpush2.bf16.msra.mxu0 0
  %397 = vmatprep.subr.bf16.mxu0 0
  %398 = vmatpush2.bf16.msra.mxu0 0
  %399 = vmatprep.mubr.bf16.mxu0 0
  %400 = vmatmul.mubr.bf16.gmra.mxu0 %v291
  %v401 = vpop.f32.mrf.mxu0
  %v402 = vadd.f32 %v337, %v401
  %v403 = vpop.f32.mrf.mxu0
  %v404 = vpop.f32.mrf.mxu0
  %v405 = vadd.f32 %v340, %v404
  %v406 = vpop.f32.mrf.mxu0
  %407 = vmatprep.mubr.bf16.mxu0 0
  %408 = vmatmul.mubr.bf16.gmra.mxu0 %v294
  %v409 = vpop.f32.mrf.mxu0
  %v410 = vadd.f32 %v345, %v409
  %v411 = vpop.f32.mrf.mxu0
  %v412 = vpop.f32.mrf.mxu0
  %v413 = vadd.f32 %v348, %v412
  %v414 = vpop.f32.mrf.mxu0
  %415 = vmatprep.mubr.bf16.mxu0 0
  %416 = vmatmul.mubr.bf16.gmra.mxu0 %v297
  %v417 = vpop.f32.mrf.mxu0
  %v418 = vadd.f32 %v353, %v417
  %v419 = vpop.f32.mrf.mxu0
  %v420 = vpop.f32.mrf.mxu0
  %v421 = vadd.f32 %v356, %v420
  %v422 = vpop.f32.mrf.mxu0
  %423 = vmatprep.mubr.bf16.mxu0 0
  %424 = vmatmul.mubr.bf16.gmra.mxu0 %v300
  %v425 = vpop.f32.mrf.mxu0
  %v426 = vadd.f32 %v361, %v425
  %v427 = vpop.f32.mrf.mxu0
  %v428 = vpop.f32.mrf.mxu0
  %v429 = vadd.f32 %v364, %v428
  %v430 = vpop.f32.mrf.mxu0
  %431 = vdwg.mxu0
  %vm432 = vcmp.gt.f32.partialorder %v402, 0.0
  %vm433 = vcmp.gt.f32.partialorder %v405, 0.0
  %vm434 = vcmp.gt.f32.partialorder %v410, 0.0
  %vm435 = vcmp.gt.f32.partialorder %v413, 0.0
  %vm436 = vcmp.gt.f32.partialorder %v418, 0.0
  %vm437 = vcmp.gt.f32.partialorder %v421, 0.0
  %vm438 = vcmp.gt.f32.partialorder %v426, 0.0
  %vm439 = vcmp.gt.f32.partialorder %v429, 0.0
  %v440 = vmul.f32 %v402, 0.2
  %v441 = vmul.f32 %v405, 0.2
  %v442 = vmul.f32 %v410, 0.2
  %v443 = vmul.f32 %v413, 0.2
  %v444 = vmul.f32 %v418, 0.2
  %v445 = vmul.f32 %v421, 0.2
  %v446 = vmul.f32 %v426, 0.2
  %v447 = vmul.f32 %v429, 0.2
  %v448 = vsel %vm432, %v402, %v440
  %v449 = vsel %vm433, %v405, %v441
  %v450 = vsel %vm434, %v410, %v442
  %v451 = vsel %vm435, %v413, %v443
  %v452 = vsel %vm436, %v418, %v444
  %v453 = vsel %vm437, %v421, %v445
  %v454 = vsel %vm438, %v426, %v446
  %v455 = vsel %vm439, %v429, %v447
  %v456 = vld [vmem:[%s3] sm:$0xff]
  %v457 = vld [vmem:[%s3 + $0x8] sm:$0xff]
  %v458 = vld [vmem:[%s3 + $0x10] sm:$0xff]
  %v459 = vld [vmem:[%s3 + $0x18] sm:$0xff]
  %v460 = vld [vmem:[%s3 + $0x20] sm:$0xff]
  %v461 = vld [vmem:[%s3 + $0x28] sm:$0xff]
  %v462 = vld [vmem:[%s3 + $0x30] sm:$0xff]
  %v463 = vld [vmem:[%s3 + $0x38] sm:$0xff]
  %465 = vset.pattern.permute.xlu0 0
  %466 = vperm.xlu0 %465, %v456
  %v467 = vpop.permute.xlu0 %466
  %470 = vset.pattern.permute.xlu0 0
  %471 = vperm.xlu0 %470, %v457
  %v472 = vpop.permute.xlu0 %471
  %475 = vset.pattern.permute.xlu0 0
  %476 = vperm.xlu0 %475, %v458
  %v477 = vpop.permute.xlu0 %476
  %480 = vset.pattern.permute.xlu0 0
  %481 = vperm.xlu0 %480, %v459
  %v482 = vpop.permute.xlu0 %481
  %485 = vset.pattern.permute.xlu0 0
  %486 = vperm.xlu0 %485, %v460
  %v487 = vpop.permute.xlu0 %486
  %490 = vset.pattern.permute.xlu0 0
  %491 = vperm.xlu0 %490, %v461
  %v492 = vpop.permute.xlu0 %491
  %495 = vset.pattern.permute.xlu0 0
  %496 = vperm.xlu0 %495, %v462
  %v497 = vpop.permute.xlu0 %496
  %500 = vset.pattern.permute.xlu0 0
  %501 = vperm.xlu0 %500, %v463
  %v502 = vpop.permute.xlu0 %501
  %v504 = vmul.f32 %v448, %v467
  %v505 = vmul.f32 %v449, %v472
  %v506 = vmul.f32 %v450, %v477
  %v507 = vmul.f32 %v451, %v482
  %v508 = vmul.f32 %v452, %v487
  %v509 = vmul.f32 %v453, %v492
  %v510 = vmul.f32 %v454, %v497
  %v511 = vmul.f32 %v455, %v502
  %v512 = vld [vmem:[%s4] sm:$0xff]
  %v513 = vld [vmem:[%s4 + $0x8] sm:$0xff]
  %v514 = vld [vmem:[%s4 + $0x10] sm:$0xff]
  %v515 = vld [vmem:[%s4 + $0x18] sm:$0xff]
  %v516 = vld [vmem:[%s4 + $0x20] sm:$0xff]
  %v517 = vld [vmem:[%s4 + $0x28] sm:$0xff]
  %v518 = vld [vmem:[%s4 + $0x30] sm:$0xff]
  %v519 = vld [vmem:[%s4 + $0x38] sm:$0xff]
  %521 = vset.pattern.permute.xlu0 0
  %522 = vperm.xlu0 %521, %v512
  %v523 = vpop.permute.xlu0 %522
  %526 = vset.pattern.permute.xlu0 0
  %527 = vperm.xlu0 %526, %v513
  %v528 = vpop.permute.xlu0 %527
  %531 = vset.pattern.permute.xlu0 0
  %532 = vperm.xlu0 %531, %v514
  %v533 = vpop.permute.xlu0 %532
  %536 = vset.pattern.permute.xlu0 0
  %537 = vperm.xlu0 %536, %v515
  %v538 = vpop.permute.xlu0 %537
  %541 = vset.pattern.permute.xlu0 0
  %542 = vperm.xlu0 %541, %v516
  %v543 = vpop.permute.xlu0 %542
  %546 = vset.pattern.permute.xlu0 0
  %547 = vperm.xlu0 %546, %v517
  %v548 = vpop.permute.xlu0 %547
  %551 = vset.pattern.permute.xlu0 0
  %552 = vperm.xlu0 %551, %v518
  %v553 = vpop.permute.xlu0 %552
  %556 = vset.pattern.permute.xlu0 0
  %557 = vperm.xlu0 %556, %v519
  %v558 = vpop.permute.xlu0 %557
  %v560 = vadd.f32 %v504, %v523
  %v561 = vadd.f32 %v505, %v528
  %v562 = vadd.f32 %v506, %v533
  %v563 = vadd.f32 %v507, %v538
  %v564 = vadd.f32 %v508, %v543
  %v565 = vadd.f32 %v509, %v548
  %v566 = vadd.f32 %v510, %v553
  %v567 = vadd.f32 %v511, %v558
  %v568 = vpack.c.bf16 %v561, %v560
  %v569 = vpack.c.bf16 %v563, %v562
  %v570 = vpack.c.bf16 %v565, %v564
  %v571 = vpack.c.bf16 %v567, %v566
  %v576 = vunpack.c.l.b16 %v568
  %v577 = vunpack.c.h.b16 %v568
  %v578 = vunpack.c.l.b16 %v569
  %v579 = vunpack.c.h.b16 %v569
  %v580 = vunpack.c.l.b16 %v570
  %v581 = vunpack.c.h.b16 %v570
  %v582 = vunpack.c.l.b16 %v571
  %v583 = vunpack.c.h.b16 %v571
  %v584 = vpack.c.b16 %v576, %v576
  %v585 = vpack.c.b16 %v577, %v577
  %v586 = vpack.c.b16 %v578, %v578
  %v587 = vpack.c.b16 %v579, %v579
  %v588 = vpack.c.b16 %v580, %v580
  %v589 = vpack.c.b16 %v581, %v581
  %v590 = vpack.c.b16 %v582, %v582
  %v591 = vpack.c.b16 %v583, %v583
  %vm600 = vcmask 60416
  %601 = vst.msk [vmem:[%s5] sm:$0xf] %vm600, %v584
  %602 = vst.msk [vmem:[%s5 + $0x4] sm:$0xf] %vm600, %v585
  %603 = vst.msk [vmem:[%s5 + $0x8] sm:$0xf] %vm600, %v586
  %604 = vst.msk [vmem:[%s5 + $0xc] sm:$0xf] %vm600, %v587
  %605 = vst.msk [vmem:[%s5 + $0x10] sm:$0xf] %vm600, %v588
  %606 = vst.msk [vmem:[%s5 + $0x14] sm:$0xf] %vm600, %v589
  %607 = vst.msk [vmem:[%s5 + $0x18] sm:$0xf] %vm600, %v590
  %608 = vst.msk [vmem:[%s5 + $0x1c] sm:$0xf] %vm600, %v591
  // Predicated region
  $region22: #{discriminator_forward.7} parent=0 // pred_check
    _
  $region23: #{discriminator_forward.7} parent=0 // pred_check_branch
    %610 = sbr.rel (0) target = $region25
  $region24: #{discriminator_forward.7} parent=0 // pred_region
    _
  $region25: #{discriminator_forward.7} parent=0 // pred_fallthru
    _
  // Predicated region
  $region26: #{discriminator_forward.7} parent=0 // pred_check
    _
  $region27: #{discriminator_forward.7} parent=0 // pred_check_branch
    %612 = sbr.rel (0) target = $region29
  $region28: #{discriminator_forward.7} parent=0 // pred_region
    _
  $region29: #{discriminator_forward.7} parent=0 // pred_fallthru
    _

// kernel: discriminator_forward.9
$region0: #{discriminator_forward.9}
  #allocation0 [shape = 'u32[]', space=smem, size = 0x4, offset = 0x4, fixed_abs, tag = 'smem constant byte address 0x4 - core index']
  #allocation1 [shape = 'u32[144,128]{1,0:T(1,128)}', space=vmem, size = 0x12000, scoped, tag = 'internal scratch']
  #allocation2 [shape = 'f32[2,128]{1,0:T(2,128)}', space=vmem, size = 0x400, scoped, tag = 'scratch operand']
  %s0 = inlined_call_operand.vmem [shape: bf16[2,128], index: 0, kind: input, shape index: {}]
  %s1 = inlined_call_operand.vmem [shape: bf16[128,128], index: 1, kind: input, shape index: {}]
  %s2 = inlined_call_operand.vmem [shape: f32[1,128], index: 2, kind: input, shape index: {}]
  %s3 = inlined_call_operand.vmem [shape: f32[2,128], index: 3, kind: output, shape index: {}]
  %s4 = sld [smem:[#allocation0]]
  $region30: #{discriminator_forward.9} parent=0
    _
  %s6 = ssub.s32 1, %s4
  %s7 = scalar_select 0, %s6, %s4
  // Predicated region
  $region2: #{discriminator_forward.9} parent=0 // pred_check
    _
  $region3: #{discriminator_forward.9} parent=0 // pred_check_branch
    %9 = sbr.rel (0) target = $region5
  $region4: #{discriminator_forward.9} parent=0 // pred_region
    _
  $region5: #{discriminator_forward.9} parent=0 // pred_fallthru
    _
  // Predicated region
  $region6: #{discriminator_forward.9} parent=0 // pred_check
    _
  $region7: #{discriminator_forward.9} parent=0 // pred_check_branch
    %11 = sbr.rel (0) target = $region9
  $region8: #{discriminator_forward.9} parent=0 // pred_region
    _
  $region9: #{discriminator_forward.9} parent=0 // pred_fallthru
    _
  // Predicated region
  $region10: #{discriminator_forward.9} parent=0 // pred_check
    _
  $region11: #{discriminator_forward.9} parent=0 // pred_check_branch
    %13 = sbr.rel (0) target = $region13
  $region12: #{discriminator_forward.9} parent=0 // pred_region
    _
  $region13: #{discriminator_forward.9} parent=0 // pred_fallthru
    _
  %p15 = scmp.eq.s32.totalorder 0, 0
  // Predicated region
  $region14: #{discriminator_forward.9} parent=0 // pred_check
    %p16 = pneg %p15
  $region15: #{discriminator_forward.9} parent=0 // pred_check_branch
    %18 = sbr.rel (%p16) target = $region17
  $region16: #{discriminator_forward.9} parent=0 // pred_region
    %19 = vst [vmem:[#allocation2] sm:$0x3] 0.0
  $region17: #{discriminator_forward.9} parent=0 // pred_fallthru
    _
  %v20 = vld [vmem:[#allocation2] sm:$0x3]
  %v21 = vld [vmem:[%s0] sm:$0x1]
  %v22 = vld [vmem:[%s1] sm:$0xf]
  %v23 = vld [vmem:[%s1 + $0x4] sm:$0xf]
  %v24 = vld [vmem:[%s1 + $0x8] sm:$0xf]
  %v25 = vld [vmem:[%s1 + $0xc] sm:$0xf]
  %v26 = vld [vmem:[%s1 + $0x10] sm:$0xf]
  %v27 = vld [vmem:[%s1 + $0x14] sm:$0xf]
  %v28 = vld [vmem:[%s1 + $0x18] sm:$0xf]
  %v29 = vld [vmem:[%s1 + $0x1c] sm:$0xf]
  %v30 = vld [vmem:[%s1 + $0x20] sm:$0xf]
  %v31 = vld [vmem:[%s1 + $0x24] sm:$0xf]
  %v32 = vld [vmem:[%s1 + $0x28] sm:$0xf]
  %v33 = vld [vmem:[%s1 + $0x2c] sm:$0xf]
  %v34 = vld [vmem:[%s1 + $0x30] sm:$0xf]
  %v35 = vld [vmem:[%s1 + $0x34] sm:$0xf]
  %v36 = vld [vmem:[%s1 + $0x38] sm:$0xf]
  %v37 = vld [vmem:[%s1 + $0x3c] sm:$0xf]
  %v54 = vunpack.c.l.b16 %v22
  %v55 = vunpack.c.l.b16 %v23
  %v56 = vunpack.c.l.b16 %v24
  %v57 = vunpack.c.l.b16 %v25
  %v58 = vunpack.c.l.b16 %v26
  %v59 = vunpack.c.l.b16 %v27
  %v60 = vunpack.c.l.b16 %v28
  %v61 = vunpack.c.l.b16 %v29
  %v62 = vunpack.c.l.b16 %v30
  %v63 = vunpack.c.l.b16 %v31
  %v64 = vunpack.c.l.b16 %v32
  %v65 = vunpack.c.l.b16 %v33
  %v66 = vunpack.c.l.b16 %v34
  %v67 = vunpack.c.l.b16 %v35
  %v68 = vunpack.c.l.b16 %v36
  %v69 = vunpack.c.l.b16 %v37
  %v70 = vpack.c.b16 %v55, %v54
  %v71 = vpack.c.b16 %v57, %v56
  %v72 = vpack.c.b16 %v59, %v58
  %v73 = vpack.c.b16 %v61, %v60
  %v74 = vpack.c.b16 %v63, %v62
  %v75 = vpack.c.b16 %v65, %v64
  %v76 = vpack.c.b16 %v67, %v66
  %v77 = vpack.c.b16 %v69, %v68
  %86 = vmatprep.subr.bf16.mxu0 0
  %87 = vmatpush1.bf16.msra.mxu0 %v77
  %88 = vmatprep.subr.bf16.mxu0 0
  %89 = vmatpush1.bf16.msra.mxu0 %v76
  %90 = vmatprep.subr.bf16.mxu0 0
  %91 = vmatpush1.bf16.msra.mxu0 %v75
  %92 = vmatprep.subr.bf16.mxu0 0
  %93 = vmatpush1.bf16.msra.mxu0 %v74
  %94 = vmatprep.subr.bf16.mxu0 0
  %95 = vmatpush1.bf16.msra.mxu0 %v73
  %96 = vmatprep.subr.bf16.mxu0 0
  %97 = vmatpush1.bf16.msra.mxu0 %v72
  %98 = vmatprep.subr.bf16.mxu0 0
  %99 = vmatpush1.bf16.msra.mxu0 %v71
  %100 = vmatprep.subr.bf16.mxu0 0
  %101 = vmatpush1.bf16.msra.mxu0 %v70
  %102 = vmatprep.subr.bf16.mxu0 0
  %103 = vmatpush2.bf16.msra.mxu0 0
  %104 = vmatprep.subr.bf16.mxu0 0
  %105 = vmatpush2.bf16.msra.mxu0 0
  %106 = vmatprep.subr.bf16.mxu0 0
  %107 = vmatpush2.bf16.msra.mxu0 0
  %108 = vmatprep.subr.bf16.mxu0 0
  %109 = vmatpush2.bf16.msra.mxu0 0
  %110 = vmatprep.subr.bf16.mxu0 0
  %111 = vmatpush2.bf16.msra.mxu0 0
  %112 = vmatprep.subr.bf16.mxu0 0
  %113 = vmatpush2.bf16.msra.mxu0 0
  %114 = vmatprep.subr.bf16.mxu0 0
  %115 = vmatpush2.bf16.msra.mxu0 0
  %116 = vmatprep.subr.bf16.mxu0 0
  %117 = vmatpush2.bf16.msra.mxu0 0
  %118 = vmatprep.mubr.bf16.mxu0 0
  %119 = vmatmul.mubr.bf16.gmra.mxu0 %v21
  %v120 = vpop.f32.mrf.mxu0
  %v121 = vadd.f32 0.0, %v120
  %v122 = vpop.f32.mrf.mxu0
  %v123 = vpop.f32.mrf.mxu0
  %v124 = vpop.f32.mrf.mxu0
  %125 = vdwg.mxu0
  %v126 = vadd.f32 %v20, %v121
  %127 = vst [vmem:[#allocation2] sm:$0x3] %v126
  // Predicated region
  $region18: #{discriminator_forward.9} parent=0 // pred_check
    %p128 = pneg %p15
  $region19: #{discriminator_forward.9} parent=0 // pred_check_branch
    %130 = sbr.rel (%p128) target = $region21
  $region20: #{discriminator_forward.9} parent=0 // pred_region
    %v131 = vld [vmem:[#allocation2] sm:$0x3]
    %v132 = vld [vmem:[%s2] sm:$0x1]
    %v134 = vlaneseq
    %v135 = vshrl.u32 %v134, 7
    %v136 = vsub.s32 0, %v135
    %v137 = vrot.slane %v132, %v136
    %v139 = vadd.f32 %v131, %v137
    %v140 = vsub.f32 0.0, %v139
    %v141 = vmul.f32 %v140, 1.442695
    %v142 = vpow.pop %v141
    %v143 = vadd.f32 %v142, 1.0
    %v144 = vrcp.pop %v143
    %v145 = vmul.f32 1.0, %v144
    %146 = vst [vmem:[%s3] sm:$0x3] %v145
  $region21: #{discriminator_forward.9} parent=0 // pred_fallthru
    _
  // Predicated region
  $region22: #{discriminator_forward.9} parent=0 // pred_check
    _
  $region23: #{discriminator_forward.9} parent=0 // pred_check_branch
    %148 = sbr.rel (0) target = $region25
  $region24: #{discriminator_forward.9} parent=0 // pred_region
    _
  $region25: #{discriminator_forward.9} parent=0 // pred_fallthru
    _
  // Predicated region
  $region26: #{discriminator_forward.9} parent=0 // pred_check
    _
  $region27: #{discriminator_forward.9} parent=0 // pred_check_branch
    %150 = sbr.rel (0) target = $region29
  $region28: #{discriminator_forward.9} parent=0 // pred_region
    _
  $region29: #{discriminator_forward.9} parent=0 // pred_fallthru
    _

// kernel: discriminator_forward.8
$region0: #{discriminator_forward.8}
  #allocation0 [shape = 'u32[]', space=smem, size = 0x4, offset = 0x4, fixed_abs, tag = 'smem constant byte address 0x4 - core index']
  #allocation1 [shape = 'u32[144,128]{1,0:T(1,128)}', space=vmem, size = 0x12000, scoped, tag = 'internal scratch']
  %s0 = inlined_call_operand.vmem [shape: bf16[576,2], index: 0, kind: input, shape index: {}]
  %s1 = inlined_call_operand.vmem [shape: bf16[128,576], index: 1, kind: input, shape index: {}]
  %s2 = inlined_call_operand.vmem [shape: f32[128,1], index: 2, kind: input, shape index: {}]
  %s3 = inlined_call_operand.vmem [shape: f32[128,1], index: 3, kind: input, shape index: {}]
  %s4 = inlined_call_operand.vmem [shape: f32[128,1], index: 4, kind: input, shape index: {}]
  %s5 = inlined_call_operand.vmem [shape: bf16[128,2], index: 5, kind: output, shape index: {}]
  %s6 = sld [smem:[#allocation0]]
  $region30: #{discriminator_forward.8} parent=0
    _
  %s8 = ssub.s32 1, %s6
  %s9 = scalar_select 0, %s8, %s6
  // Predicated region
  $region2: #{discriminator_forward.8} parent=0 // pred_check
    _
  $region3: #{discriminator_forward.8} parent=0 // pred_check_branch
    %11 = sbr.rel (0) target = $region5
  $region4: #{discriminator_forward.8} parent=0 // pred_region
    _
  $region5: #{discriminator_forward.8} parent=0 // pred_fallthru
    _
  // Predicated region
  $region6: #{discriminator_forward.8} parent=0 // pred_check
    _
  $region7: #{discriminator_forward.8} parent=0 // pred_check_branch
    %13 = sbr.rel (0) target = $region9
  $region8: #{discriminator_forward.8} parent=0 // pred_region
    _
  $region9: #{discriminator_forward.8} parent=0 // pred_fallthru
    _
  // Predicated region
  $region10: #{discriminator_forward.8} parent=0 // pred_check
    _
  $region11: #{discriminator_forward.8} parent=0 // pred_check_branch
    %15 = sbr.rel (0) target = $region13
  $region12: #{discriminator_forward.8} parent=0 // pred_region
    _
  $region13: #{discriminator_forward.8} parent=0 // pred_fallthru
    _
  // Predicated region
  $region14: #{discriminator_forward.8} parent=0 // pred_check
    _
  $region15: #{discriminator_forward.8} parent=0 // pred_check_branch
    %17 = sbr.rel (0) target = $region17
  $region16: #{discriminator_forward.8} parent=0 // pred_region
    _
  $region17: #{discriminator_forward.8} parent=0 // pred_fallthru
    _
  // Predicated region
  $region18: #{discriminator_forward.8} parent=0 // pred_check
    _
  $region19: #{discriminator_forward.8} parent=0 // pred_check_branch
    %19 = sbr.rel (0) target = $region21
  $region20: #{discriminator_forward.8} parent=0 // pred_region
    _
  $region21: #{discriminator_forward.8} parent=0 // pred_fallthru
    _
  %v21 = vld [vmem:[%s1] sm:$0xff]
  %v22 = vld [vmem:[%s1 + $0x8] sm:$0xff]
  %v23 = vld [vmem:[%s1 + $0x10] sm:$0xf]
  %v24 = vld [vmem:[%s1 + $0x14] sm:$0xff]
  %v25 = vld [vmem:[%s1 + $0x1c] sm:$0xff]
  %v26 = vld [vmem:[%s1 + $0x24] sm:$0xf]
  %v27 = vld [vmem:[%s1 + $0x28] sm:$0xff]
  %v28 = vld [vmem:[%s1 + $0x30] sm:$0xff]
  %v29 = vld [vmem:[%s1 + $0x38] sm:$0xf]
  %v30 = vld [vmem:[%s1 + $0x3c] sm:$0xff]
  %v31 = vld [vmem:[%s1 + $0x44] sm:$0xff]
  %v32 = vld [vmem:[%s1 + $0x4c] sm:$0xf]
  %v33 = vld [vmem:[%s1 + $0x50] sm:$0xff]
  %v34 = vld [vmem:[%s1 + $0x58] sm:$0xff]
  %v35 = vld [vmem:[%s1 + $0x60] sm:$0xf]
  %v36 = vld [vmem:[%s1 + $0x64] sm:$0xff]
  %v37 = vld [vmem:[%s1 + $0x6c] sm:$0xff]
  %v38 = vld [vmem:[%s1 + $0x74] sm:$0xf]
  %v39 = vld [vmem:[%s1 + $0x78] sm:$0xff]
  %v40 = vld [vmem:[%s1 + $0x80] sm:$0xff]
  %v41 = vld [vmem:[%s1 + $0x88] sm:$0xf]
  %v42 = vld [vmem:[%s1 + $0x8c] sm:$0xff]
  %v43 = vld [vmem:[%s1 + $0x94] sm:$0xff]
  %v44 = vld [vmem:[%s1 + $0x9c] sm:$0xf]
  %v45 = vld [vmem:[%s1 + $0xa0] sm:$0xff]
  %v46 = vld [vmem:[%s1 + $0xa8] sm:$0xff]
  %v47 = vld [vmem:[%s1 + $0xb0] sm:$0xf]
  %v48 = vld [vmem:[%s1 + $0xb4] sm:$0xff]
  %v49 = vld [vmem:[%s1 + $0xbc] sm:$0xff]
  %v50 = vld [vmem:[%s1 + $0xc4] sm:$0xf]
  %v51 = vld [vmem:[%s1 + $0xc8] sm:$0xff]
  %v52 = vld [vmem:[%s1 + $0xd0] sm:$0xff]
  %v53 = vld [vmem:[%s1 + $0xd8] sm:$0xf]
  %v54 = vld [vmem:[%s1 + $0xdc] sm:$0xff]
  %v55 = vld [vmem:[%s1 + $0xe4] sm:$0xff]
  %v56 = vld [vmem:[%s1 + $0xec] sm:$0xf]
  %v57 = vld [vmem:[%s1 + $0xf0] sm:$0xff]
  %v58 = vld [vmem:[%s1 + $0xf8] sm:$0xff]
  %v59 = vld [vmem:[%s1 + $0x100] sm:$0xf]
  %v60 = vld [vmem:[%s1 + $0x104] sm:$0xff]
  %v61 = vld [vmem:[%s1 + $0x10c] sm:$0xff]
  %v62 = vld [vmem:[%s1 + $0x114] sm:$0xf]
  %v63 = vld [vmem:[%s1 + $0x118] sm:$0xff]
  %v64 = vld [vmem:[%s1 + $0x120] sm:$0xff]
  %v65 = vld [vmem:[%s1 + $0x128] sm:$0xf]
  %v66 = vld [vmem:[%s1 + $0x12c] sm:$0xff]
  %v67 = vld [vmem:[%s1 + $0x134] sm:$0xff]
  %v68 = vld [vmem:[%s1 + $0x13c] sm:$0xf]
  %v69 = vld [vmem:[%s0] sm:$0xf]
  %v70 = vld [vmem:[%s0 + $0x4] sm:$0xf]
  %v71 = vld [vmem:[%s0 + $0x8] sm:$0xf]
  %v72 = vld [vmem:[%s0 + $0xc] sm:$0xf]
  %v73 = vld [vmem:[%s0 + $0x10] sm:$0xf]
  %v74 = vld [vmem:[%s0 + $0x14] sm:$0xf]
  %v75 = vld [vmem:[%s0 + $0x18] sm:$0xf]
  %v76 = vld [vmem:[%s0 + $0x1c] sm:$0xf]
  %v77 = vld [vmem:[%s0 + $0x20] sm:$0xf]
  %v78 = vld [vmem:[%s0 + $0x24] sm:$0xf]
  %v79 = vld [vmem:[%s0 + $0x28] sm:$0xf]
  %v80 = vld [vmem:[%s0 + $0x2c] sm:$0xf]
  %v81 = vld [vmem:[%s0 + $0x30] sm:$0xf]
  %v82 = vld [vmem:[%s0 + $0x34] sm:$0xf]
  %v83 = vld [vmem:[%s0 + $0x38] sm:$0xf]
  %v84 = vld [vmem:[%s0 + $0x3c] sm:$0xf]
  %v85 = vld [vmem:[%s0 + $0x40] sm:$0xf]
  %v86 = vld [vmem:[%s0 + $0x44] sm:$0xf]
  %v87 = vld [vmem:[%s0 + $0x48] sm:$0xf]
  %v88 = vld [vmem:[%s0 + $0x4c] sm:$0xf]
  %v89 = vld [vmem:[%s0 + $0x50] sm:$0xf]
  %v90 = vld [vmem:[%s0 + $0x54] sm:$0xf]
  %v91 = vld [vmem:[%s0 + $0x58] sm:$0xf]
  %v92 = vld [vmem:[%s0 + $0x5c] sm:$0xf]
  %v93 = vld [vmem:[%s0 + $0x60] sm:$0xf]
  %v94 = vld [vmem:[%s0 + $0x64] sm:$0xf]
  %v95 = vld [vmem:[%s0 + $0x68] sm:$0xf]
  %v96 = vld [vmem:[%s0 + $0x6c] sm:$0xf]
  %v97 = vld [vmem:[%s0 + $0x70] sm:$0xf]
  %v98 = vld [vmem:[%s0 + $0x74] sm:$0xf]
  %v99 = vld [vmem:[%s0 + $0x78] sm:$0xf]
  %v100 = vld [vmem:[%s0 + $0x7c] sm:$0xf]
  %v101 = vld [vmem:[%s0 + $0x80] sm:$0xf]
  %v102 = vld [vmem:[%s0 + $0x84] sm:$0xf]
  %v103 = vld [vmem:[%s0 + $0x88] sm:$0xf]
  %v104 = vld [vmem:[%s0 + $0x8c] sm:$0xf]
  %v105 = vld [vmem:[%s0 + $0x90] sm:$0xf]
  %v106 = vld [vmem:[%s0 + $0x94] sm:$0xf]
  %v107 = vld [vmem:[%s0 + $0x98] sm:$0xf]
  %v108 = vld [vmem:[%s0 + $0x9c] sm:$0xf]
  %v109 = vld [vmem:[%s0 + $0xa0] sm:$0xf]
  %v110 = vld [vmem:[%s0 + $0xa4] sm:$0xf]
  %v111 = vld [vmem:[%s0 + $0xa8] sm:$0xf]
  %v112 = vld [vmem:[%s0 + $0xac] sm:$0xf]
  %v113 = vld [vmem:[%s0 + $0xb0] sm:$0xf]
  %v114 = vld [vmem:[%s0 + $0xb4] sm:$0xf]
  %v115 = vld [vmem:[%s0 + $0xb8] sm:$0xf]
  %v116 = vld [vmem:[%s0 + $0xbc] sm:$0xf]
  %v117 = vld [vmem:[%s0 + $0xc0] sm:$0xf]
  %v118 = vld [vmem:[%s0 + $0xc4] sm:$0xf]
  %v119 = vld [vmem:[%s0 + $0xc8] sm:$0xf]
  %v120 = vld [vmem:[%s0 + $0xcc] sm:$0xf]
  %v121 = vld [vmem:[%s0 + $0xd0] sm:$0xf]
  %v122 = vld [vmem:[%s0 + $0xd4] sm:$0xf]
  %v123 = vld [vmem:[%s0 + $0xd8] sm:$0xf]
  %v124 = vld [vmem:[%s0 + $0xdc] sm:$0xf]
  %v125 = vld [vmem:[%s0 + $0xe0] sm:$0xf]
  %v126 = vld [vmem:[%s0 + $0xe4] sm:$0xf]
  %v127 = vld [vmem:[%s0 + $0xe8] sm:$0xf]
  %v128 = vld [vmem:[%s0 + $0xec] sm:$0xf]
  %v129 = vld [vmem:[%s0 + $0xf0] sm:$0xf]
  %v130 = vld [vmem:[%s0 + $0xf4] sm:$0xf]
  %v131 = vld [vmem:[%s0 + $0xf8] sm:$0xf]
  %v132 = vld [vmem:[%s0 + $0xfc] sm:$0xf]
  %v133 = vld [vmem:[%s0 + $0x100] sm:$0xf]
  %v134 = vld [vmem:[%s0 + $0x104] sm:$0xf]
  %v135 = vld [vmem:[%s0 + $0x108] sm:$0xf]
  %v136 = vld [vmem:[%s0 + $0x10c] sm:$0xf]
  %v137 = vld [vmem:[%s0 + $0x110] sm:$0xf]
  %v138 = vld [vmem:[%s0 + $0x114] sm:$0xf]
  %v139 = vld [vmem:[%s0 + $0x118] sm:$0xf]
  %v140 = vld [vmem:[%s0 + $0x11c] sm:$0xf]
  %v141 = vld [vmem:[%s2] sm:$0xff]
  %v142 = vld [vmem:[%s2 + $0x8] sm:$0xff]
  %v143 = vld [vmem:[%s2 + $0x10] sm:$0xff]
  %v144 = vld [vmem:[%s2 + $0x18] sm:$0xff]
  %v145 = vld [vmem:[%s2 + $0x20] sm:$0xff]
  %v146 = vld [vmem:[%s2 + $0x28] sm:$0xff]
  %v147 = vld [vmem:[%s2 + $0x30] sm:$0xff]
  %v148 = vld [vmem:[%s2 + $0x38] sm:$0xff]
  %v149 = vld [vmem:[%s2 + $0x40] sm:$0xff]
  %v150 = vld [vmem:[%s2 + $0x48] sm:$0xff]
  %v151 = vld [vmem:[%s2 + $0x50] sm:$0xff]
  %v152 = vld [vmem:[%s2 + $0x58] sm:$0xff]
  %v153 = vld [vmem:[%s2 + $0x60] sm:$0xff]
  %v154 = vld [vmem:[%s2 + $0x68] sm:$0xff]
  %v155 = vld [vmem:[%s2 + $0x70] sm:$0xff]
  %v156 = vld [vmem:[%s2 + $0x78] sm:$0xff]
  %158 = vset.pattern.permute.xlu0 0
  %159 = vperm.xlu0 %158, %v141
  %v160 = vpop.permute.xlu0 %159
  %163 = vset.pattern.permute.xlu0 0
  %164 = vperm.xlu0 %163, %v142
  %v165 = vpop.permute.xlu0 %164
  %168 = vset.pattern.permute.xlu0 0
  %169 = vperm.xlu0 %168, %v143
  %v170 = vpop.permute.xlu0 %169
  %173 = vset.pattern.permute.xlu0 0
  %174 = vperm.xlu0 %173, %v144
  %v175 = vpop.permute.xlu0 %174
  %178 = vset.pattern.permute.xlu0 0
  %179 = vperm.xlu0 %178, %v145
  %v180 = vpop.permute.xlu0 %179
  %183 = vset.pattern.permute.xlu0 0
  %184 = vperm.xlu0 %183, %v146
  %v185 = vpop.permute.xlu0 %184
  %188 = vset.pattern.permute.xlu0 0
  %189 = vperm.xlu0 %188, %v147
  %v190 = vpop.permute.xlu0 %189
  %193 = vset.pattern.permute.xlu0 0
  %194 = vperm.xlu0 %193, %v148
  %v195 = vpop.permute.xlu0 %194
  %198 = vset.pattern.permute.xlu0 0
  %199 = vperm.xlu0 %198, %v149
  %v200 = vpop.permute.xlu0 %199
  %203 = vset.pattern.permute.xlu0 0
  %204 = vperm.xlu0 %203, %v150
  %v205 = vpop.permute.xlu0 %204
  %208 = vset.pattern.permute.xlu0 0
  %209 = vperm.xlu0 %208, %v151
  %v210 = vpop.permute.xlu0 %209
  %213 = vset.pattern.permute.xlu0 0
  %214 = vperm.xlu0 %213, %v152
  %v215 = vpop.permute.xlu0 %214
  %218 = vset.pattern.permute.xlu0 0
  %219 = vperm.xlu0 %218, %v153
  %v220 = vpop.permute.xlu0 %219
  %223 = vset.pattern.permute.xlu0 0
  %224 = vperm.xlu0 %223, %v154
  %v225 = vpop.permute.xlu0 %224
  %228 = vset.pattern.permute.xlu0 0
  %229 = vperm.xlu0 %228, %v155
  %v230 = vpop.permute.xlu0 %229
  %233 = vset.pattern.permute.xlu0 0
  %234 = vperm.xlu0 %233, %v156
  %v235 = vpop.permute.xlu0 %234
  %v285 = vunpack.c.l.b16 %v21
  %v286 = vunpack.c.h.b16 %v21
  %v287 = vunpack.c.l.b16 %v22
  %v288 = vunpack.c.h.b16 %v22
  %v289 = vunpack.c.l.b16 %v23
  %v290 = vunpack.c.l.b16 %v24
  %v291 = vunpack.c.h.b16 %v24
  %v292 = vunpack.c.l.b16 %v25
  %v293 = vunpack.c.h.b16 %v25
  %v294 = vunpack.c.l.b16 %v26
  %v295 = vunpack.c.l.b16 %v27
  %v296 = vunpack.c.h.b16 %v27
  %v297 = vunpack.c.l.b16 %v28
  %v298 = vunpack.c.h.b16 %v28
  %v299 = vunpack.c.l.b16 %v29
  %v300 = vunpack.c.l.b16 %v30
  %v301 = vunpack.c.h.b16 %v30
  %v302 = vunpack.c.l.b16 %v31
  %v303 = vunpack.c.h.b16 %v31
  %v304 = vunpack.c.l.b16 %v32
  %v305 = vunpack.c.l.b16 %v33
  %v306 = vunpack.c.h.b16 %v33
  %v307 = vunpack.c.l.b16 %v34
  %v308 = vunpack.c.h.b16 %v34
  %v309 = vunpack.c.l.b16 %v35
  %v310 = vunpack.c.l.b16 %v36
  %v311 = vunpack.c.h.b16 %v36
  %v312 = vunpack.c.l.b16 %v37
  %v313 = vunpack.c.h.b16 %v37
  %v314 = vunpack.c.l.b16 %v38
  %v315 = vunpack.c.l.b16 %v39
  %v316 = vunpack.c.h.b16 %v39
  %v317 = vunpack.c.l.b16 %v40
  %v318 = vunpack.c.h.b16 %v40
  %v319 = vunpack.c.l.b16 %v41
  %v320 = vunpack.c.l.b16 %v42
  %v321 = vunpack.c.h.b16 %v42
  %v322 = vunpack.c.l.b16 %v43
  %v323 = vunpack.c.h.b16 %v43
  %v324 = vunpack.c.l.b16 %v44
  %v325 = vunpack.c.l.b16 %v45
  %v326 = vunpack.c.h.b16 %v45
  %v327 = vunpack.c.l.b16 %v46
  %v328 = vunpack.c.h.b16 %v46
  %v329 = vunpack.c.l.b16 %v47
  %v330 = vunpack.c.l.b16 %v48
  %v331 = vunpack.c.h.b16 %v48
  %v332 = vunpack.c.l.b16 %v49
  %v333 = vunpack.c.h.b16 %v49
  %v334 = vunpack.c.l.b16 %v50
  %v335 = vunpack.c.l.b16 %v51
  %v336 = vunpack.c.h.b16 %v51
  %v337 = vunpack.c.l.b16 %v52
  %v338 = vunpack.c.h.b16 %v52
  %v339 = vunpack.c.l.b16 %v53
  %v340 = vunpack.c.l.b16 %v54
  %v341 = vunpack.c.h.b16 %v54
  %v342 = vunpack.c.l.b16 %v55
  %v343 = vunpack.c.h.b16 %v55
  %v344 = vunpack.c.l.b16 %v56
  %v345 = vunpack.c.l.b16 %v57
  %v346 = vunpack.c.h.b16 %v57
  %v347 = vunpack.c.l.b16 %v58
  %v348 = vunpack.c.h.b16 %v58
  %v349 = vunpack.c.l.b16 %v59
  %v350 = vunpack.c.l.b16 %v60
  %v351 = vunpack.c.h.b16 %v60
  %v352 = vunpack.c.l.b16 %v61
  %v353 = vunpack.c.h.b16 %v61
  %v354 = vunpack.c.l.b16 %v62
  %v355 = vunpack.c.l.b16 %v63
  %v356 = vunpack.c.h.b16 %v63
  %v357 = vunpack.c.l.b16 %v64
  %v358 = vunpack.c.h.b16 %v64
  %v359 = vunpack.c.l.b16 %v65
  %v360 = vunpack.c.l.b16 %v66
  %v361 = vunpack.c.h.b16 %v66
  %v362 = vunpack.c.l.b16 %v67
  %v363 = vunpack.c.h.b16 %v67
  %v364 = vunpack.c.l.b16 %v68
  %v365 = vpack.c.b16 %v290, %v285
  %v366 = vpack.c.b16 %v291, %v286
  %v367 = vpack.c.b16 %v292, %v287
  %v368 = vpack.c.b16 %v293, %v288
  %v369 = vpack.c.b16 %v294, %v289
  %v370 = vpack.c.b16 %v300, %v295
  %v371 = vpack.c.b16 %v301, %v296
  %v372 = vpack.c.b16 %v302, %v297
  %v373 = vpack.c.b16 %v303, %v298
  %v374 = vpack.c.b16 %v304, %v299
  %v375 = vpack.c.b16 %v310, %v305
  %v376 = vpack.c.b16 %v311, %v306
  %v377 = vpack.c.b16 %v312, %v307
  %v378 = vpack.c.b16 %v313, %v308
  %v379 = vpack.c.b16 %v314, %v309
  %v380 = vpack.c.b16 %v320, %v315
  %v381 = vpack.c.b16 %v321, %v316
  %v382 = vpack.c.b16 %v322, %v317
  %v383 = vpack.c.b16 %v323, %v318
  %v384 = vpack.c.b16 %v324, %v319
  %v385 = vpack.c.b16 %v330, %v325
  %v386 = vpack.c.b16 %v331, %v326
  %v387 = vpack.c.b16 %v332, %v327
  %v388 = vpack.c.b16 %v333, %v328
  %v389 = vpack.c.b16 %v334, %v329
  %v390 = vpack.c.b16 %v340, %v335
  %v391 = vpack.c.b16 %v341, %v336
  %v392 = vpack.c.b16 %v342, %v337
  %v393 = vpack.c.b16 %v343, %v338
  %v394 = vpack.c.b16 %v344, %v339
  %v395 = vpack.c.b16 %v350, %v345
  %v396 = vpack.c.b16 %v351, %v346
  %v397 = vpack.c.b16 %v352, %v347
  %v398 = vpack.c.b16 %v353, %v348
  %v399 = vpack.c.b16 %v354, %v349
  %v400 = vpack.c.b16 %v360, %v355
  %v401 = vpack.c.b16 %v361, %v356
  %v402 = vpack.c.b16 %v362, %v357
  %v403 = vpack.c.b16 %v363, %v358
  %v404 = vpack.c.b16 %v364, %v359
  %v509 = vunpack.c.l.b16 %v69
  %v510 = vunpack.c.l.b16 %v70
  %v511 = vunpack.c.l.b16 %v71
  %v512 = vunpack.c.l.b16 %v72
  %v513 = vunpack.c.l.b16 %v73
  %v514 = vunpack.c.l.b16 %v74
  %v515 = vunpack.c.l.b16 %v75
  %v516 = vunpack.c.l.b16 %v76
  %v517 = vunpack.c.l.b16 %v77
  %v518 = vunpack.c.l.b16 %v78
  %v519 = vunpack.c.l.b16 %v79
  %v520 = vunpack.c.l.b16 %v80
  %v521 = vunpack.c.l.b16 %v81
  %v522 = vunpack.c.l.b16 %v82
  %v523 = vunpack.c.l.b16 %v83
  %v524 = vunpack.c.l.b16 %v84
  %v525 = vunpack.c.l.b16 %v85
  %v526 = vunpack.c.l.b16 %v86
  %v527 = vunpack.c.l.b16 %v87
  %v528 = vunpack.c.l.b16 %v88
  %v529 = vunpack.c.l.b16 %v89
  %v530 = vunpack.c.l.b16 %v90
  %v531 = vunpack.c.l.b16 %v91
  %v532 = vunpack.c.l.b16 %v92
  %v533 = vunpack.c.l.b16 %v93
  %v534 = vunpack.c.l.b16 %v94
  %v535 = vunpack.c.l.b16 %v95
  %v536 = vunpack.c.l.b16 %v96
  %v537 = vunpack.c.l.b16 %v97
  %v538 = vunpack.c.l.b16 %v98
  %v539 = vunpack.c.l.b16 %v99
  %v540 = vunpack.c.l.b16 %v100
  %v541 = vunpack.c.l.b16 %v101
  %v542 = vunpack.c.l.b16 %v102
  %v543 = vunpack.c.l.b16 %v103
  %v544 = vunpack.c.l.b16 %v104
  %v545 = vunpack.c.l.b16 %v105
  %v546 = vunpack.c.l.b16 %v106
  %v547 = vunpack.c.l.b16 %v107
  %v548 = vunpack.c.l.b16 %v108
  %v549 = vunpack.c.l.b16 %v109
  %v550 = vunpack.c.l.b16 %v110
  %v551 = vunpack.c.l.b16 %v111
  %v552 = vunpack.c.l.b16 %v112
  %v553 = vunpack.c.l.b16 %v113
  %v554 = vunpack.c.l.b16 %v114
  %v555 = vunpack.c.l.b16 %v115
  %v556 = vunpack.c.l.b16 %v116
  %v557 = vunpack.c.l.b16 %v117
  %v558 = vunpack.c.l.b16 %v118
  %v559 = vunpack.c.l.b16 %v119
  %v560 = vunpack.c.l.b16 %v120
  %v561 = vunpack.c.l.b16 %v121
  %v562 = vunpack.c.l.b16 %v122
  %v563 = vunpack.c.l.b16 %v123
  %v564 = vunpack.c.l.b16 %v124
  %v565 = vunpack.c.l.b16 %v125
  %v566 = vunpack.c.l.b16 %v126
  %v567 = vunpack.c.l.b16 %v127
  %v568 = vunpack.c.l.b16 %v128
  %v569 = vunpack.c.l.b16 %v129
  %v570 = vunpack.c.l.b16 %v130
  %v571 = vunpack.c.l.b16 %v131
  %v572 = vunpack.c.l.b16 %v132
  %v573 = vunpack.c.l.b16 %v133
  %v574 = vunpack.c.l.b16 %v134
  %v575 = vunpack.c.l.b16 %v135
  %v576 = vunpack.c.l.b16 %v136
  %v577 = vunpack.c.l.b16 %v137
  %v578 = vunpack.c.l.b16 %v138
  %v579 = vunpack.c.l.b16 %v139
  %v580 = vunpack.c.l.b16 %v140
  %v581 = vpack.c.b16 %v510, %v509
  %v582 = vpack.c.b16 %v512, %v511
  %v583 = vpack.c.b16 %v514, %v513
  %v584 = vpack.c.b16 %v516, %v515
  %v585 = vpack.c.b16 %v518, %v517
  %v586 = vpack.c.b16 %v520, %v519
  %v587 = vpack.c.b16 %v522, %v521
  %v588 = vpack.c.b16 %v524, %v523
  %v589 = vpack.c.b16 %v526, %v525
  %v590 = vpack.c.b16 %v528, %v527
  %v591 = vpack.c.b16 %v530, %v529
  %v592 = vpack.c.b16 %v532, %v531
  %v593 = vpack.c.b16 %v534, %v533
  %v594 = vpack.c.b16 %v536, %v535
  %v595 = vpack.c.b16 %v538, %v537
  %v596 = vpack.c.b16 %v540, %v539
  %v597 = vpack.c.b16 %v542, %v541
  %v598 = vpack.c.b16 %v544, %v543
  %v599 = vpack.c.b16 %v546, %v545
  %v600 = vpack.c.b16 %v548, %v547
  %v601 = vpack.c.b16 %v550, %v549
  %v602 = vpack.c.b16 %v552, %v551
  %v603 = vpack.c.b16 %v554, %v553
  %v604 = vpack.c.b16 %v556, %v555
  %v605 = vpack.c.b16 %v558, %v557
  %v606 = vpack.c.b16 %v560, %v559
  %v607 = vpack.c.b16 %v562, %v561
  %v608 = vpack.c.b16 %v564, %v563
  %v609 = vpack.c.b16 %v566, %v565
  %v610 = vpack.c.b16 %v568, %v567
  %v611 = vpack.c.b16 %v570, %v569
  %v612 = vpack.c.b16 %v572, %v571
  %v613 = vpack.c.b16 %v574, %v573
  %v614 = vpack.c.b16 %v576, %v575
  %v615 = vpack.c.b16 %v578, %v577
  %v616 = vpack.c.b16 %v580, %v579
  %vm653 = vcmask 523264
  %v655 = vsel %vm653, %v369, 0
  %v658 = vsel %vm653, %v374, 0
  %v661 = vsel %vm653, %v379, 0
  %v664 = vsel %vm653, %v384, 0
  %v667 = vsel %vm653, %v389, 0
  %v670 = vsel %vm653, %v394, 0
  %v673 = vsel %vm653, %v399, 0
  %v676 = vsel %vm653, %v404, 0
  %678 = vmatprep.subr.bf16.mxu0 0
  %679 = vmatpush1.bf16.msra.mxu0 %v588
  %680 = vmatprep.subr.bf16.mxu0 0
  %681 = vmatpush1.bf16.msra.mxu0 %v587
  %682 = vmatprep.subr.bf16.mxu0 0
  %683 = vmatpush1.bf16.msra.mxu0 %v586
  %684 = vmatprep.subr.bf16.mxu0 0
  %685 = vmatpush1.bf16.msra.mxu0 %v585
  %686 = vmatprep.subr.bf16.mxu0 0
  %687 = vmatpush1.bf16.msra.mxu0 %v584
  %688 = vmatprep.subr.bf16.mxu0 0
  %689 = vmatpush1.bf16.msra.mxu0 %v583
  %690 = vmatprep.subr.bf16.mxu0 0
  %691 = vmatpush1.bf16.msra.mxu0 %v582
  %692 = vmatprep.subr.bf16.mxu0 0
  %693 = vmatpush1.bf16.msra.mxu0 %v581
  %694 = vmatprep.subr.bf16.mxu0 0
  %695 = vmatpush2.bf16.msra.mxu0 %v596
  %696 = vmatprep.subr.bf16.mxu0 0
  %697 = vmatpush2.bf16.msra.mxu0 %v595
  %698 = vmatprep.subr.bf16.mxu0 0
  %699 = vmatpush2.bf16.msra.mxu0 %v594
  %700 = vmatprep.subr.bf16.mxu0 0
  %701 = vmatpush2.bf16.msra.mxu0 %v593
  %702 = vmatprep.subr.bf16.mxu0 0
  %703 = vmatpush2.bf16.msra.mxu0 %v592
  %704 = vmatprep.subr.bf16.mxu0 0
  %705 = vmatpush2.bf16.msra.mxu0 %v591
  %706 = vmatprep.subr.bf16.mxu0 0
  %707 = vmatpush2.bf16.msra.mxu0 %v590
  %708 = vmatprep.subr.bf16.mxu0 0
  %709 = vmatpush2.bf16.msra.mxu0 %v589
  %710 = vmatprep.mubr.bf16.mxu0 %v366
  %711 = vmatmul.mubr.bf16.gmra.mxu0 %v365
  %v712 = vpop.f32.mrf.mxu0
  %v713 = vadd.f32 %v160, %v712
  %v714 = vpop.f32.mrf.mxu0
  %v715 = vpop.f32.mrf.mxu0
  %v716 = vadd.f32 %v165, %v715
  %v717 = vpop.f32.mrf.mxu0
  %718 = vmatprep.mubr.bf16.mxu0 %v371
  %719 = vmatmul.mubr.bf16.gmra.mxu0 %v370
  %v720 = vpop.f32.mrf.mxu0
  %v721 = vadd.f32 %v170, %v720
  %v722 = vpop.f32.mrf.mxu0
  %v723 = vpop.f32.mrf.mxu0
  %v724 = vadd.f32 %v175, %v723
  %v725 = vpop.f32.mrf.mxu0
  %726 = vmatprep.mubr.bf16.mxu0 %v376
  %727 = vmatmul.mubr.bf16.gmra.mxu0 %v375
  %v728 = vpop.f32.mrf.mxu0
  %v729 = vadd.f32 %v180, %v728
  %v730 = vpop.f32.mrf.mxu0
  %v731 = vpop.f32.mrf.mxu0
  %v732 = vadd.f32 %v185, %v731
  %v733 = vpop.f32.mrf.mxu0
  %734 = vmatprep.mubr.bf16.mxu0 %v381
  %735 = vmatmul.mubr.bf16.gmra.mxu0 %v380
  %v736 = vpop.f32.mrf.mxu0
  %v737 = vadd.f32 %v190, %v736
  %v738 = vpop.f32.mrf.mxu0
  %v739 = vpop.f32.mrf.mxu0
  %v740 = vadd.f32 %v195, %v739
  %v741 = vpop.f32.mrf.mxu0
  %742 = vmatprep.mubr.bf16.mxu0 %v386
  %743 = vmatmul.mubr.bf16.gmra.mxu0 %v385
  %v744 = vpop.f32.mrf.mxu0
  %v745 = vadd.f32 %v200, %v744
  %v746 = vpop.f32.mrf.mxu0
  %v747 = vpop.f32.mrf.mxu0
  %v748 = vadd.f32 %v205, %v747
  %v749 = vpop.f32.mrf.mxu0
  %750 = vmatprep.mubr.bf16.mxu0 %v391
  %751 = vmatmul.mubr.bf16.gmra.mxu0 %v390
  %v752 = vpop.f32.mrf.mxu0
  %v753 = vadd.f32 %v210, %v752
  %v754 = vpop.f32.mrf.mxu0
  %v755 = vpop.f32.mrf.mxu0
  %v756 = vadd.f32 %v215, %v755
  %v757 = vpop.f32.mrf.mxu0
  %758 = vmatprep.mubr.bf16.mxu0 %v396
  %759 = vmatmul.mubr.bf16.gmra.mxu0 %v395
  %v760 = vpop.f32.mrf.mxu0
  %v761 = vadd.f32 %v220, %v760
  %v762 = vpop.f32.mrf.mxu0
  %v763 = vpop.f32.mrf.mxu0
  %v764 = vadd.f32 %v225, %v763
  %v765 = vpop.f32.mrf.mxu0
  %766 = vmatprep.mubr.bf16.mxu0 %v401
  %767 = vmatmul.mubr.bf16.gmra.mxu0 %v400
  %v768 = vpop.f32.mrf.mxu0
  %v769 = vadd.f32 %v230, %v768
  %v770 = vpop.f32.mrf.mxu0
  %v771 = vpop.f32.mrf.mxu0
  %v772 = vadd.f32 %v235, %v771
  %v773 = vpop.f32.mrf.mxu0
  %774 = vdwg.mxu0
  %775 = vmatprep.subr.bf16.mxu0 0
  %776 = vmatpush1.bf16.msra.mxu0 %v604
  %777 = vmatprep.subr.bf16.mxu0 0
  %778 = vmatpush1.bf16.msra.mxu0 %v603
  %779 = vmatprep.subr.bf16.mxu0 0
  %780 = vmatpush1.bf16.msra.mxu0 %v602
  %781 = vmatprep.subr.bf16.mxu0 0
  %782 = vmatpush1.bf16.msra.mxu0 %v601
  %783 = vmatprep.subr.bf16.mxu0 0
  %784 = vmatpush1.bf16.msra.mxu0 %v600
  %785 = vmatprep.subr.bf16.mxu0 0
  %786 = vmatpush1.bf16.msra.mxu0 %v599
  %787 = vmatprep.subr.bf16.mxu0 0
  %788 = vmatpush1.bf16.msra.mxu0 %v598
  %789 = vmatprep.subr.bf16.mxu0 0
  %790 = vmatpush1.bf16.msra.mxu0 %v597
  %791 = vmatprep.subr.bf16.mxu0 0
  %792 = vmatpush2.bf16.msra.mxu0 %v612
  %793 = vmatprep.subr.bf16.mxu0 0
  %794 = vmatpush2.bf16.msra.mxu0 %v611
  %795 = vmatprep.subr.bf16.mxu0 0
  %796 = vmatpush2.bf16.msra.mxu0 %v610
  %797 = vmatprep.subr.bf16.mxu0 0
  %798 = vmatpush2.bf16.msra.mxu0 %v609
  %799 = vmatprep.subr.bf16.mxu0 0
  %800 = vmatpush2.bf16.msra.mxu0 %v608
  %801 = vmatprep.subr.bf16.mxu0 0
  %802 = vmatpush2.bf16.msra.mxu0 %v607
  %803 = vmatprep.subr.bf16.mxu0 0
  %804 = vmatpush2.bf16.msra.mxu0 %v606
  %805 = vmatprep.subr.bf16.mxu0 0
  %806 = vmatpush2.bf16.msra.mxu0 %v605
  %807 = vmatprep.mubr.bf16.mxu0 %v368
  %808 = vmatmul.mubr.bf16.gmra.mxu0 %v367
  %v809 = vpop.f32.mrf.mxu0
  %v810 = vadd.f32 %v713, %v809
  %v811 = vpop.f32.mrf.mxu0
  %v812 = vpop.f32.mrf.mxu0
  %v813 = vadd.f32 %v716, %v812
  %v814 = vpop.f32.mrf.mxu0
  %815 = vmatprep.mubr.bf16.mxu0 %v373
  %816 = vmatmul.mubr.bf16.gmra.mxu0 %v372
  %v817 = vpop.f32.mrf.mxu0
  %v818 = vadd.f32 %v721, %v817
  %v819 = vpop.f32.mrf.mxu0
  %v820 = vpop.f32.mrf.mxu0
  %v821 = vadd.f32 %v724, %v820
  %v822 = vpop.f32.mrf.mxu0
  %823 = vmatprep.mubr.bf16.mxu0 %v378
  %824 = vmatmul.mubr.bf16.gmra.mxu0 %v377
  %v825 = vpop.f32.mrf.mxu0
  %v826 = vadd.f32 %v729, %v825
  %v827 = vpop.f32.mrf.mxu0
  %v828 = vpop.f32.mrf.mxu0
  %v829 = vadd.f32 %v732, %v828
  %v830 = vpop.f32.mrf.mxu0
  %831 = vmatprep.mubr.bf16.mxu0 %v383
  %832 = vmatmul.mubr.bf16.gmra.mxu0 %v382
  %v833 = vpop.f32.mrf.mxu0
  %v834 = vadd.f32 %v737, %v833
  %v835 = vpop.f32.mrf.mxu0
  %v836 = vpop.f32.mrf.mxu0
  %v837 = vadd.f32 %v740, %v836
  %v838 = vpop.f32.mrf.mxu0
  %839 = vmatprep.mubr.bf16.mxu0 %v388
  %840 = vmatmul.mubr.bf16.gmra.mxu0 %v387
  %v841 = vpop.f32.mrf.mxu0
  %v842 = vadd.f32 %v745, %v841
  %v843 = vpop.f32.mrf.mxu0
  %v844 = vpop.f32.mrf.mxu0
  %v845 = vadd.f32 %v748, %v844
  %v846 = vpop.f32.mrf.mxu0
  %847 = vmatprep.mubr.bf16.mxu0 %v393
  %848 = vmatmul.mubr.bf16.gmra.mxu0 %v392
  %v849 = vpop.f32.mrf.mxu0
  %v850 = vadd.f32 %v753, %v849
  %v851 = vpop.f32.mrf.mxu0
  %v852 = vpop.f32.mrf.mxu0
  %v853 = vadd.f32 %v756, %v852
  %v854 = vpop.f32.mrf.mxu0
  %855 = vmatprep.mubr.bf16.mxu0 %v398
  %856 = vmatmul.mubr.bf16.gmra.mxu0 %v397
  %v857 = vpop.f32.mrf.mxu0
  %v858 = vadd.f32 %v761, %v857
  %v859 = vpop.f32.mrf.mxu0
  %v860 = vpop.f32.mrf.mxu0
  %v861 = vadd.f32 %v764, %v860
  %v862 = vpop.f32.mrf.mxu0
  %863 = vmatprep.mubr.bf16.mxu0 %v403
  %864 = vmatmul.mubr.bf16.gmra.mxu0 %v402
  %v865 = vpop.f32.mrf.mxu0
  %v866 = vadd.f32 %v769, %v865
  %v867 = vpop.f32.mrf.mxu0
  %v868 = vpop.f32.mrf.mxu0
  %v869 = vadd.f32 %v772, %v868
  %v870 = vpop.f32.mrf.mxu0
  %871 = vdwg.mxu0
  %872 = vmatprep.subr.bf16.mxu0 0
  %873 = vmatpush1.bf16.msra.mxu0 0
  %874 = vmatprep.subr.bf16.mxu0 0
  %875 = vmatpush1.bf16.msra.mxu0 0
  %876 = vmatprep.subr.bf16.mxu0 0
  %877 = vmatpush1.bf16.msra.mxu0 0
  %878 = vmatprep.subr.bf16.mxu0 0
  %879 = vmatpush1.bf16.msra.mxu0 0
  %880 = vmatprep.subr.bf16.mxu0 0
  %881 = vmatpush1.bf16.msra.mxu0 %v616
  %882 = vmatprep.subr.bf16.mxu0 0
  %883 = vmatpush1.bf16.msra.mxu0 %v615
  %884 = vmatprep.subr.bf16.mxu0 0
  %885 = vmatpush1.bf16.msra.mxu0 %v614
  %886 = vmatprep.subr.bf16.mxu0 0
  %887 = vmatpush1.bf16.msra.mxu0 %v613
  %888 = vmatprep.subr.bf16.mxu0 0
  %889 = vmatpush2.bf16.msra.mxu0 0
  %890 = vmatprep.subr.bf16.mxu0 0
  %891 = vmatpush2.bf16.msra.mxu0 0
  %892 = vmatprep.subr.bf16.mxu0 0
  %893 = vmatpush2.bf16.msra.mxu0 0
  %894 = vmatprep.subr.bf16.mxu0 0
  %895 = vmatpush2.bf16.msra.mxu0 0
  %896 = vmatprep.subr.bf16.mxu0 0
  %897 = vmatpush2.bf16.msra.mxu0 0
  %898 = vmatprep.subr.bf16.mxu0 0
  %899 = vmatpush2.bf16.msra.mxu0 0
  %900 = vmatprep.subr.bf16.mxu0 0
  %901 = vmatpush2.bf16.msra.mxu0 0
  %902 = vmatprep.subr.bf16.mxu0 0
  %903 = vmatpush2.bf16.msra.mxu0 0
  %904 = vmatprep.mubr.bf16.mxu0 0
  %905 = vmatmul.mubr.bf16.gmra.mxu0 %v655
  %v906 = vpop.f32.mrf.mxu0
  %v907 = vadd.f32 %v810, %v906
  %v908 = vpop.f32.mrf.mxu0
  %v909 = vpop.f32.mrf.mxu0
  %v910 = vadd.f32 %v813, %v909
  %v911 = vpop.f32.mrf.mxu0
  %912 = vmatprep.mubr.bf16.mxu0 0
  %913 = vmatmul.mubr.bf16.gmra.mxu0 %v658
  %v914 = vpop.f32.mrf.mxu0
  %v915 = vadd.f32 %v818, %v914
  %v916 = vpop.f32.mrf.mxu0
  %v917 = vpop.f32.mrf.mxu0
  %v918 = vadd.f32 %v821, %v917
  %v919 = vpop.f32.mrf.mxu0
  %920 = vmatprep.mubr.bf16.mxu0 0
  %921 = vmatmul.mubr.bf16.gmra.mxu0 %v661
  %v922 = vpop.f32.mrf.mxu0
  %v923 = vadd.f32 %v826, %v922
  %v924 = vpop.f32.mrf.mxu0
  %v925 = vpop.f32.mrf.mxu0
  %v926 = vadd.f32 %v829, %v925
  %v927 = vpop.f32.mrf.mxu0
  %928 = vmatprep.mubr.bf16.mxu0 0
  %929 = vmatmul.mubr.bf16.gmra.mxu0 %v664
  %v930 = vpop.f32.mrf.mxu0
  %v931 = vadd.f32 %v834, %v930
  %v932 = vpop.f32.mrf.mxu0
  %v933 = vpop.f32.mrf.mxu0
  %v934 = vadd.f32 %v837, %v933
  %v935 = vpop.f32.mrf.mxu0
  %936 = vmatprep.mubr.bf16.mxu0 0
  %937 = vmatmul.mubr.bf16.gmra.mxu0 %v667
  %v938 = vpop.f32.mrf.mxu0
  %v939 = vadd.f32 %v842, %v938
  %v940 = vpop.f32.mrf.mxu0
  %v941 = vpop.f32.mrf.mxu0
  %v942 = vadd.f32 %v845, %v941
  %v943 = vpop.f32.mrf.mxu0
  %944 = vmatprep.mubr.bf16.mxu0 0
  %945 = vmatmul.mubr.bf16.gmra.mxu0 %v670
  %v946 = vpop.f32.mrf.mxu0
  %v947 = vadd.f32 %v850, %v946
  %v948 = vpop.f32.mrf.mxu0
  %v949 = vpop.f32.mrf.mxu0
  %v950 = vadd.f32 %v853, %v949
  %v951 = vpop.f32.mrf.mxu0
  %952 = vmatprep.mubr.bf16.mxu0 0
  %953 = vmatmul.mubr.bf16.gmra.mxu0 %v673
  %v954 = vpop.f32.mrf.mxu0
  %v955 = vadd.f32 %v858, %v954
  %v956 = vpop.f32.mrf.mxu0
  %v957 = vpop.f32.mrf.mxu0
  %v958 = vadd.f32 %v861, %v957
  %v959 = vpop.f32.mrf.mxu0
  %960 = vmatprep.mubr.bf16.mxu0 0
  %961 = vmatmul.mubr.bf16.gmra.mxu0 %v676
  %v962 = vpop.f32.mrf.mxu0
  %v963 = vadd.f32 %v866, %v962
  %v964 = vpop.f32.mrf.mxu0
  %v965 = vpop.f32.mrf.mxu0
  %v966 = vadd.f32 %v869, %v965
  %v967 = vpop.f32.mrf.mxu0
  %968 = vdwg.mxu0
  %vm969 = vcmp.gt.f32.partialorder %v907, 0.0
  %vm970 = vcmp.gt.f32.partialorder %v910, 0.0
  %vm971 = vcmp.gt.f32.partialorder %v915, 0.0
  %vm972 = vcmp.gt.f32.partialorder %v918, 0.0
  %vm973 = vcmp.gt.f32.partialorder %v923, 0.0
  %vm974 = vcmp.gt.f32.partialorder %v926, 0.0
  %vm975 = vcmp.gt.f32.partialorder %v931, 0.0
  %vm976 = vcmp.gt.f32.partialorder %v934, 0.0
  %vm977 = vcmp.gt.f32.partialorder %v939, 0.0
  %vm978 = vcmp.gt.f32.partialorder %v942, 0.0
  %vm979 = vcmp.gt.f32.partialorder %v947, 0.0
  %vm980 = vcmp.gt.f32.partialorder %v950, 0.0
  %vm981 = vcmp.gt.f32.partialorder %v955, 0.0
  %vm982 = vcmp.gt.f32.partialorder %v958, 0.0
  %vm983 = vcmp.gt.f32.partialorder %v963, 0.0
  %vm984 = vcmp.gt.f32.partialorder %v966, 0.0
  %v985 = vmul.f32 %v907, 0.2
  %v986 = vmul.f32 %v910, 0.2
  %v987 = vmul.f32 %v915, 0.2
  %v988 = vmul.f32 %v918, 0.2
  %v989 = vmul.f32 %v923, 0.2
  %v990 = vmul.f32 %v926, 0.2
  %v991 = vmul.f32 %v931, 0.2
  %v992 = vmul.f32 %v934, 0.2
  %v993 = vmul.f32 %v939, 0.2
  %v994 = vmul.f32 %v942, 0.2
  %v995 = vmul.f32 %v947, 0.2
  %v996 = vmul.f32 %v950, 0.2
  %v997 = vmul.f32 %v955, 0.2
  %v998 = vmul.f32 %v958, 0.2
  %v999 = vmul.f32 %v963, 0.2
  %v1000 = vmul.f32 %v966, 0.2
  %v1001 = vsel %vm969, %v907, %v985
  %v1002 = vsel %vm970, %v910, %v986
  %v1003 = vsel %vm971, %v915, %v987
  %v1004 = vsel %vm972, %v918, %v988
  %v1005 = vsel %vm973, %v923, %v989
  %v1006 = vsel %vm974, %v926, %v990
  %v1007 = vsel %vm975, %v931, %v991
  %v1008 = vsel %vm976, %v934, %v992
  %v1009 = vsel %vm977, %v939, %v993
  %v1010 = vsel %vm978, %v942, %v994
  %v1011 = vsel %vm979, %v947, %v995
  %v1012 = vsel %vm980, %v950, %v996
  %v1013 = vsel %vm981, %v955, %v997
  %v1014 = vsel %vm982, %v958, %v998
  %v1015 = vsel %vm983, %v963, %v999
  %v1016 = vsel %vm984, %v966, %v1000
  %v1017 = vld [vmem:[%s3] sm:$0xff]
  %v1018 = vld [vmem:[%s3 + $0x8] sm:$0xff]
  %v1019 = vld [vmem:[%s3 + $0x10] sm:$0xff]
  %v1020 = vld [vmem:[%s3 + $0x18] sm:$0xff]
  %v1021 = vld [vmem:[%s3 + $0x20] sm:$0xff]
  %v1022 = vld [vmem:[%s3 + $0x28] sm:$0xff]
  %v1023 = vld [vmem:[%s3 + $0x30] sm:$0xff]
  %v1024 = vld [vmem:[%s3 + $0x38] sm:$0xff]
  %v1025 = vld [vmem:[%s3 + $0x40] sm:$0xff]
  %v1026 = vld [vmem:[%s3 + $0x48] sm:$0xff]
  %v1027 = vld [vmem:[%s3 + $0x50] sm:$0xff]
  %v1028 = vld [vmem:[%s3 + $0x58] sm:$0xff]
  %v1029 = vld [vmem:[%s3 + $0x60] sm:$0xff]
  %v1030 = vld [vmem:[%s3 + $0x68] sm:$0xff]
  %v1031 = vld [vmem:[%s3 + $0x70] sm:$0xff]
  %v1032 = vld [vmem:[%s3 + $0x78] sm:$0xff]
  %1034 = vset.pattern.permute.xlu0 0
  %1035 = vperm.xlu0 %1034, %v1017
  %v1036 = vpop.permute.xlu0 %1035
  %1039 = vset.pattern.permute.xlu0 0
  %1040 = vperm.xlu0 %1039, %v1018
  %v1041 = vpop.permute.xlu0 %1040
  %1044 = vset.pattern.permute.xlu0 0
  %1045 = vperm.xlu0 %1044, %v1019
  %v1046 = vpop.permute.xlu0 %1045
  %1049 = vset.pattern.permute.xlu0 0
  %1050 = vperm.xlu0 %1049, %v1020
  %v1051 = vpop.permute.xlu0 %1050
  %1054 = vset.pattern.permute.xlu0 0
  %1055 = vperm.xlu0 %1054, %v1021
  %v1056 = vpop.permute.xlu0 %1055
  %1059 = vset.pattern.permute.xlu0 0
  %1060 = vperm.xlu0 %1059, %v1022
  %v1061 = vpop.permute.xlu0 %1060
  %1064 = vset.pattern.permute.xlu0 0
  %1065 = vperm.xlu0 %1064, %v1023
  %v1066 = vpop.permute.xlu0 %1065
  %1069 = vset.pattern.permute.xlu0 0
  %1070 = vperm.xlu0 %1069, %v1024
  %v1071 = vpop.permute.xlu0 %1070
  %1074 = vset.pattern.permute.xlu0 0
  %1075 = vperm.xlu0 %1074, %v1025
  %v1076 = vpop.permute.xlu0 %1075
  %1079 = vset.pattern.permute.xlu0 0
  %1080 = vperm.xlu0 %1079, %v1026
  %v1081 = vpop.permute.xlu0 %1080
  %1084 = vset.pattern.permute.xlu0 0
  %1085 = vperm.xlu0 %1084, %v1027
  %v1086 = vpop.permute.xlu0 %1085
  %1089 = vset.pattern.permute.xlu0 0
  %1090 = vperm.xlu0 %1089, %v1028
  %v1091 = vpop.permute.xlu0 %1090
  %1094 = vset.pattern.permute.xlu0 0
  %1095 = vperm.xlu0 %1094, %v1029
  %v1096 = vpop.permute.xlu0 %1095
  %1099 = vset.pattern.permute.xlu0 0
  %1100 = vperm.xlu0 %1099, %v1030
  %v1101 = vpop.permute.xlu0 %1100
  %1104 = vset.pattern.permute.xlu0 0
  %1105 = vperm.xlu0 %1104, %v1031
  %v1106 = vpop.permute.xlu0 %1105
  %1109 = vset.pattern.permute.xlu0 0
  %1110 = vperm.xlu0 %1109, %v1032
  %v1111 = vpop.permute.xlu0 %1110
  %v1113 = vmul.f32 %v1001, %v1036
  %v1114 = vmul.f32 %v1002, %v1041
  %v1115 = vmul.f32 %v1003, %v1046
  %v1116 = vmul.f32 %v1004, %v1051
  %v1117 = vmul.f32 %v1005, %v1056
  %v1118 = vmul.f32 %v1006, %v1061
  %v1119 = vmul.f32 %v1007, %v1066
  %v1120 = vmul.f32 %v1008, %v1071
  %v1121 = vmul.f32 %v1009, %v1076
  %v1122 = vmul.f32 %v1010, %v1081
  %v1123 = vmul.f32 %v1011, %v1086
  %v1124 = vmul.f32 %v1012, %v1091
  %v1125 = vmul.f32 %v1013, %v1096
  %v1126 = vmul.f32 %v1014, %v1101
  %v1127 = vmul.f32 %v1015, %v1106
  %v1128 = vmul.f32 %v1016, %v1111
  %v1129 = vld [vmem:[%s4] sm:$0xff]
  %v1130 = vld [vmem:[%s4 + $0x8] sm:$0xff]
  %v1131 = vld [vmem:[%s4 + $0x10] sm:$0xff]
  %v1132 = vld [vmem:[%s4 + $0x18] sm:$0xff]
  %v1133 = vld [vmem:[%s4 + $0x20] sm:$0xff]
  %v1134 = vld [vmem:[%s4 + $0x28] sm:$0xff]
  %v1135 = vld [vmem:[%s4 + $0x30] sm:$0xff]
  %v1136 = vld [vmem:[%s4 + $0x38] sm:$0xff]
  %v1137 = vld [vmem:[%s4 + $0x40] sm:$0xff]
  %v1138 = vld [vmem:[%s4 + $0x48] sm:$0xff]
  %v1139 = vld [vmem:[%s4 + $0x50] sm:$0xff]
  %v1140 = vld [vmem:[%s4 + $0x58] sm:$0xff]
  %v1141 = vld [vmem:[%s4 + $0x60] sm:$0xff]
  %v1142 = vld [vmem:[%s4 + $0x68] sm:$0xff]
  %v1143 = vld [vmem:[%s4 + $0x70] sm:$0xff]
  %v1144 = vld [vmem:[%s4 + $0x78] sm:$0xff]
  %1146 = vset.pattern.permute.xlu0 0
  %1147 = vperm.xlu0 %1146, %v1129
  %v1148 = vpop.permute.xlu0 %1147
  %1151 = vset.pattern.permute.xlu0 0
  %1152 = vperm.xlu0 %1151, %v1130
  %v1153 = vpop.permute.xlu0 %1152
  %1156 = vset.pattern.permute.xlu0 0
  %1157 = vperm.xlu0 %1156, %v1131
  %v1158 = vpop.permute.xlu0 %1157
  %1161 = vset.pattern.permute.xlu0 0
  %1162 = vperm.xlu0 %1161, %v1132
  %v1163 = vpop.permute.xlu0 %1162
  %1166 = vset.pattern.permute.xlu0 0
  %1167 = vperm.xlu0 %1166, %v1133
  %v1168 = vpop.permute.xlu0 %1167
  %1171 = vset.pattern.permute.xlu0 0
  %1172 = vperm.xlu0 %1171, %v1134
  %v1173 = vpop.permute.xlu0 %1172
  %1176 = vset.pattern.permute.xlu0 0
  %1177 = vperm.xlu0 %1176, %v1135
  %v1178 = vpop.permute.xlu0 %1177
  %1181 = vset.pattern.permute.xlu0 0
  %1182 = vperm.xlu0 %1181, %v1136
  %v1183 = vpop.permute.xlu0 %1182
  %1186 = vset.pattern.permute.xlu0 0
  %1187 = vperm.xlu0 %1186, %v1137
  %v1188 = vpop.permute.xlu0 %1187
  %1191 = vset.pattern.permute.xlu0 0
  %1192 = vperm.xlu0 %1191, %v1138
  %v1193 = vpop.permute.xlu0 %1192
  %1196 = vset.pattern.permute.xlu0 0
  %1197 = vperm.xlu0 %1196, %v1139
  %v1198 = vpop.permute.xlu0 %1197
  %1201 = vset.pattern.permute.xlu0 0
  %1202 = vperm.xlu0 %1201, %v1140
  %v1203 = vpop.permute.xlu0 %1202
  %1206 = vset.pattern.permute.xlu0 0
  %1207 = vperm.xlu0 %1206, %v1141
  %v1208 = vpop.permute.xlu0 %1207
  %1211 = vset.pattern.permute.xlu0 0
  %1212 = vperm.xlu0 %1211, %v1142
  %v1213 = vpop.permute.xlu0 %1212
  %1216 = vset.pattern.permute.xlu0 0
  %1217 = vperm.xlu0 %1216, %v1143
  %v1218 = vpop.permute.xlu0 %1217
  %1221 = vset.pattern.permute.xlu0 0
  %1222 = vperm.xlu0 %1221, %v1144
  %v1223 = vpop.permute.xlu0 %1222
  %v1225 = vadd.f32 %v1113, %v1148
  %v1226 = vadd.f32 %v1114, %v1153
  %v1227 = vadd.f32 %v1115, %v1158
  %v1228 = vadd.f32 %v1116, %v1163
  %v1229 = vadd.f32 %v1117, %v1168
  %v1230 = vadd.f32 %v1118, %v1173
  %v1231 = vadd.f32 %v1119, %v1178
  %v1232 = vadd.f32 %v1120, %v1183
  %v1233 = vadd.f32 %v1121, %v1188
  %v1234 = vadd.f32 %v1122, %v1193
  %v1235 = vadd.f32 %v1123, %v1198
  %v1236 = vadd.f32 %v1124, %v1203
  %v1237 = vadd.f32 %v1125, %v1208
  %v1238 = vadd.f32 %v1126, %v1213
  %v1239 = vadd.f32 %v1127, %v1218
  %v1240 = vadd.f32 %v1128, %v1223
  %v1241 = vpack.c.bf16 %v1226, %v1225
  %v1242 = vpack.c.bf16 %v1228, %v1227
  %v1243 = vpack.c.bf16 %v1230, %v1229
  %v1244 = vpack.c.bf16 %v1232, %v1231
  %v1245 = vpack.c.bf16 %v1234, %v1233
  %v1246 = vpack.c.bf16 %v1236, %v1235
  %v1247 = vpack.c.bf16 %v1238, %v1237
  %v1248 = vpack.c.bf16 %v1240, %v1239
  %v1257 = vunpack.c.l.b16 %v1241
  %v1258 = vunpack.c.h.b16 %v1241
  %v1259 = vunpack.c.l.b16 %v1242
  %v1260 = vunpack.c.h.b16 %v1242
  %v1261 = vunpack.c.l.b16 %v1243
  %v1262 = vunpack.c.h.b16 %v1243
  %v1263 = vunpack.c.l.b16 %v1244
  %v1264 = vunpack.c.h.b16 %v1244
  %v1265 = vunpack.c.l.b16 %v1245
  %v1266 = vunpack.c.h.b16 %v1245
  %v1267 = vunpack.c.l.b16 %v1246
  %v1268 = vunpack.c.h.b16 %v1246
  %v1269 = vunpack.c.l.b16 %v1247
  %v1270 = vunpack.c.h.b16 %v1247
  %v1271 = vunpack.c.l.b16 %v1248
  %v1272 = vunpack.c.h.b16 %v1248
  %v1273 = vpack.c.b16 %v1257, %v1257
  %v1274 = vpack.c.b16 %v1258, %v1258
  %v1275 = vpack.c.b16 %v1259, %v1259
  %v1276 = vpack.c.b16 %v1260, %v1260
  %v1277 = vpack.c.b16 %v1261, %v1261
  %v1278 = vpack.c.b16 %v1262, %v1262
  %v1279 = vpack.c.b16 %v1263, %v1263
  %v1280 = vpack.c.b16 %v1264, %v1264
  %v1281 = vpack.c.b16 %v1265, %v1265
  %v1282 = vpack.c.b16 %v1266, %v1266
  %v1283 = vpack.c.b16 %v1267, %v1267
  %v1284 = vpack.c.b16 %v1268, %v1268
  %v1285 = vpack.c.b16 %v1269, %v1269
  %v1286 = vpack.c.b16 %v1270, %v1270
  %v1287 = vpack.c.b16 %v1271, %v1271
  %v1288 = vpack.c.b16 %v1272, %v1272
  %vm1305 = vcmask 11264
  %1306 = vst.msk [vmem:[%s5] sm:$0xf] %vm1305, %v1273
  %1307 = vst.msk [vmem:[%s5 + $0x4] sm:$0xf] %vm1305, %v1274
  %1308 = vst.msk [vmem:[%s5 + $0x8] sm:$0xf] %vm1305, %v1275
  %1309 = vst.msk [vmem:[%s5 + $0xc] sm:$0xf] %vm1305, %v1276
  %1310 = vst.msk [vmem:[%s5 + $0x10] sm:$0xf] %vm1305, %v1277
  %1311 = vst.msk [vmem:[%s5 + $0x14] sm:$0xf] %vm1305, %v1278
  %1312 = vst.msk [vmem:[%s5 + $0x18] sm:$0xf] %vm1305, %v1279
  %1313 = vst.msk [vmem:[%s5 + $0x1c] sm:$0xf] %vm1305, %v1280
  %1314 = vst.msk [vmem:[%s5 + $0x20] sm:$0xf] %vm1305, %v1281
  %1315 = vst.msk [vmem:[%s5 + $0x24] sm:$0xf] %vm1305, %v1282
  %1316 = vst.msk [vmem:[%s5 + $0x28] sm:$0xf] %vm1305, %v1283
  %1317 = vst.msk [vmem:[%s5 + $0x2c] sm:$0xf] %vm1305, %v1284
  %1318 = vst.msk [vmem:[%s5 + $0x30] sm:$0xf] %vm1305, %v1285
  %1319 = vst.msk [vmem:[%s5 + $0x34] sm:$0xf] %vm1305, %v1286
  %1320 = vst.msk [vmem:[%s5 + $0x38] sm:$0xf] %vm1305, %v1287
  %1321 = vst.msk [vmem:[%s5 + $0x3c] sm:$0xf] %vm1305, %v1288
  // Predicated region
  $region22: #{discriminator_forward.8} parent=0 // pred_check
    _
  $region23: #{discriminator_forward.8} parent=0 // pred_check_branch
    %1323 = sbr.rel (0) target = $region25
  $region24: #{discriminator_forward.8} parent=0 // pred_region
    _
  $region25: #{discriminator_forward.8} parent=0 // pred_fallthru
    _
  // Predicated region
  $region26: #{discriminator_forward.8} parent=0 // pred_check
    _
  $region27: #{discriminator_forward.8} parent=0 // pred_check_branch
    %1325 = sbr.rel (0) target = $region29
  $region28: #{discriminator_forward.8} parent=0 // pred_region
    _
  $region29: #{discriminator_forward.8} parent=0 // pred_fallthru
    _

</llo_original>
